<compile_context>
chip_gen: v5e
topology: v5e:2x2
jax: 0.10.0
libtpu: 0.0.40
codegen_flags: <defaults>
</compile_context>

<pallas_src>
import jax
import jax.numpy as jnp
from jax.experimental import pallas as pl
from jax.experimental.pallas import tpu as pltpu  # noqa: F401  (kept for TPU-specific tuning hooks)


def _layernorm(x, g, b, eps=1e-5):
    """LayerNorm with fused statistics: sum(x) and sum(x*x) in one pass."""
    mu = jnp.mean(x, axis=-1, keepdims=True)
    ms = jnp.mean(x * x, axis=-1, keepdims=True)
    var = ms - mu * mu
    return (x - mu) * jax.lax.rsqrt(var + eps) * g + b


def _attention_core(q3, k3, v3, wo, bo, num_heads):
    """Scaled dot-product attention + output projection.

    q3: (B, S_q, E), k3/v3: (B, S_kv, E).  Returns (B*S_q, E).
    Score and PV contractions are batched over B (leading batch dim);
    the head axis is an unrolled loop (see module comment).
    """
    B, S_q, E = q3.shape
    dh = E // num_heads
    scale = 1.0 / (dh ** 0.5)
    outs = []
    for h in range(num_heads):
        sl = slice(h * dh, (h + 1) * dh)
        qh = q3[:, :, sl] * scale
        kh = k3[:, :, sl]
        vh = v3[:, :, sl]
        s = jnp.einsum('bqd,bkd->bqk', qh, kh,
                       preferred_element_type=jnp.float32)
        s = s - jnp.max(s, axis=-1, keepdims=True)
        p = jnp.exp(s)
        # softmax denominator via the otherwise-idle EUP approximate reciprocal
        p = p * pl.reciprocal(jnp.sum(p, axis=-1, keepdims=True), approx=True)
        outs.append(jnp.einsum('bqk,bkd->bqd', p, vh,
                               preferred_element_type=jnp.float32))
    attn = jnp.concatenate(outs, axis=-1).reshape(B * S_q, E)
    return jnp.dot(attn, wo, preferred_element_type=jnp.float32) + bo


def standard_decoder_layer(x, params, num_heads):
    """Pallas TPU kernel wrapper.  x: (B, S, E) float32."""
    B, S, E = x.shape

    def kernel(x_ref, *refs):
        out_ref = refs[-1]
        (w_qkv_sa, b_qkv_sa, wo_sa, bo_sa, g1, be1,
         lq, wq_qa, bq_qa, w_kv_qa, b_kv_qa, wo_qa, bo_qa,
         g_lo, b_lo, g_fo, b_fo,
         w1, b1, w2, b2, g2, be2) = refs[:-1]

        N = B * S
        x2d = x_ref[...].reshape(N, E)                       # sublane-aligned merge

        # --- self-attention (fused QKV) + residual + norm1 ---
        qkv = jnp.dot(x2d, w_qkv_sa[...],
                      preferred_element_type=jnp.float32) + b_qkv_sa[...]
        q3 = qkv[:, :E].reshape(B, S, E)
        k3 = qkv[:, E:2 * E].reshape(B, S, E)
        v3 = qkv[:, 2 * E:].reshape(B, S, E)
        sa = _attention_core(q3, k3, v3, wo_sa[...], bo_sa[...], num_heads)
        x1 = _layernorm(x2d + sa, g1[...], be1[...])         # (N, E)

        # --- AutoregressiveQueryAugmentation (fusion_method='add') ---
        NQ = lq.shape[0]
        # learned-query Q projection is batch independent: compute once, broadcast.
        q_lq = jnp.dot(lq[...], wq_qa[...],
                       preferred_element_type=jnp.float32) + bq_qa[...]
        q_lq3 = jnp.broadcast_to(q_lq[None], (B, NQ, E))
        kv = jnp.dot(x1, w_kv_qa[...],
                     preferred_element_type=jnp.float32) + b_kv_qa[...]
        k3q = kv[:, :E].reshape(B, S, E)
        v3q = kv[:, E:].reshape(B, S, E)
        qa = _attention_core(q_lq3, k3q, v3q, wo_qa[...], bo_qa[...], num_heads)
        qa = _layernorm(qa, g_lo[...], b_lo[...])            # (B*NQ, E)
        agg = jnp.mean(qa.reshape(B, NQ, E), axis=1, keepdims=True)   # (B, 1, E)
        aug = _layernorm((x1.reshape(B, S, E) + agg).reshape(N, E),
                         g_fo[...], b_fo[...])               # (N, E)

        # --- FFN + residual + norm2 ---
        hh = jnp.maximum(
            jnp.dot(aug, w1[...], preferred_element_type=jnp.float32) + b1[...],
            0.0)
        ffn = jnp.dot(hh, w2[...], preferred_element_type=jnp.float32) + b2[...]
        out_ref[...] = _layernorm(aug + ffn, g2[...], be2[...]).reshape(B, S, E)

    # Gridless call: every operand (tiny at these sizes) is mapped whole into VMEM,
    # the body runs once, and the result is written back with a single DMA.
    return pl.pallas_call(
        kernel,
        out_shape=jax.ShapeDtypeStruct((B, S, E), jnp.float32),
    )(x, *params)


def ref_forward(x, params, num_heads):
    """Pure-JAX reference (exact softmax division, two-pass layernorm) for validation."""
    (w_qkv_sa, b_qkv_sa, wo_sa, bo_sa, g1, be1,
     lq, wq_qa, bq_qa, w_kv_qa, b_kv_qa, wo_qa, bo_qa,
     g_lo, b_lo, g_fo, b_fo,
     w1, b1, w2, b2, g2, be2) = params
    E = x.shape[-1]
    H = num_heads
    dh = E // H

    def ln(v, g, b, eps=1e-5):
        mu = jnp.mean(v, -1, keepdims=True)
        var = jnp.mean((v - mu) ** 2, -1, keepdims=True)
        return (v - mu) / jnp.sqrt(var + eps) * g + b

    def mha(q_in, kv_in, wq, bq, wk, bk, wv, bv, wo, bo):
        q = q_in @ wq + bq
        k = kv_in @ wk + bk
        v = kv_in @ wv + bv

        def split(t):
            return t.reshape(-1, H, dh).transpose(1, 0, 2)

        qh, kh, vh = split(q) / jnp.sqrt(dh), split(k), split(v)
        s = jnp.einsum('hqd,hkd->hqk', qh, kh)
        p = jax.nn.softmax(s, axis=-1)
        o = jnp.einsum('hqk,hkd->hqd', p, vh).transpose(1, 0, 2).reshape(-1, E)
        return o @ wo + bo

    wq_sa, wk_sa, wv_sa = w_qkv_sa[:, :E], w_qkv_sa[:, E:2 * E], w_qkv_sa[:, 2 * E:]
    bq_sa, bk_sa, bv_sa = b_qkv_sa[:, :E], b_qkv_sa[:, E:2 * E], b_qkv_sa[:, 2 * E:]
    wk_qa, wv_qa = w_kv_qa[:, :E], w_kv_qa[:, E:]
    bk_qa, bv_qa = b_kv_qa[:, :E], b_kv_qa[:, E:]

    def one(xt):
        sa = mha(xt, xt, wq_sa, bq_sa, wk_sa, bk_sa, wv_sa, bv_sa, wo_sa, bo_sa)
        x1 = ln(xt + sa, g1, be1)
        qa = mha(lq, x1, wq_qa, bq_qa, wk_qa, bk_qa, wv_qa, bv_qa, wo_qa, bo_qa)
        qa = ln(qa, g_lo, b_lo)
        agg = jnp.mean(qa, axis=0, keepdims=True)
        aug = ln(x1 + agg, g_fo, b_fo)
        hh = jnp.maximum(aug @ w1 + b1, 0.0)
        ffn = hh @ w2 + b2
        return ln(aug + ffn, g2, be2)

    return jax.vmap(one)(x)


if __name__ == "__main__":
    B, S, E, H, FF, NQ = 2, 8, 32, 4, 64, 16

    key = jax.random.PRNGKey(0)
    keys = jax.random.split(key, 16)

    def nrm(k, shape, std=0.02):
        return (std * jax.random.normal(k, shape)).astype(jnp.float32)

    ones = lambda n: jnp.ones((1, n), jnp.float32)
    zeros = lambda n: jnp.zeros((1, n), jnp.float32)

    params = (
        # self-attention: fused in-proj (pre-transposed, (E,3E)) + bias, out-proj + bias
        nrm(keys[0], (E, 3 * E)), nrm(keys[1], (1, 3 * E)),
        nrm(keys[2], (E, E)), nrm(keys[3], (1, E)),
        # norm1
        ones(E), zeros(E),
        # learned queries (num_learned_queries=16)
        nrm(keys[4], (NQ, E)),
        # query-augmentation attention: Q proj, fused K/V proj, out-proj (+ biases)
        nrm(keys[5], (E, E)), nrm(keys[6], (1, E)),
        nrm(keys[7], (E, 2 * E)), nrm(keys[8], (1, 2 * E)),
        nrm(keys[9], (E, E)), nrm(keys[10], (1, E)),
        # norm_learned_output, norm_final_output
        ones(E), zeros(E), ones(E), zeros(E),
        # ffn: Linear(E, FF) -> ReLU -> Linear(FF, E)   (weights pre-transposed)
        nrm(keys[11], (E, FF)), nrm(keys[12], (1, FF)),
        nrm(keys[13], (FF, E)), nrm(keys[14], (1, E)),
        # norm2
        ones(E), zeros(E),
    )

    x = jax.random.normal(keys[15], (B, S, E), jnp.float32)

    out = jax.block_until_ready(standard_decoder_layer(x, params, H))
    ref = jax.block_until_ready(ref_forward(x, params, H))

    assert out.shape == (B, S, E)
    # Tolerance relaxed from 1e-4 to 1e-3 solely to cover the EUP approximate-reciprocal
    # softmax normalization inside the kernel (the exact-division variant matches at 1e-4).
    assert jnp.allclose(out, ref, atol=1e-3, rtol=1e-3), \
        "Pallas output mismatch vs JAX reference"

    print("KERNEL_OK")
</pallas_src>

<mosaic_0001>
module attributes {stable_mosaic.version = 11 : i64} {
  func.func @kernel(%arg0: memref<2x8x32xf32, #tpu.memory_space<vmem>>, %arg1: memref<32x96xf32, #tpu.memory_space<vmem>>, %arg2: memref<1x96xf32, #tpu.memory_space<vmem>>, %arg3: memref<32x32xf32, #tpu.memory_space<vmem>>, %arg4: memref<1x32xf32, #tpu.memory_space<vmem>>, %arg5: memref<1x32xf32, #tpu.memory_space<vmem>>, %arg6: memref<1x32xf32, #tpu.memory_space<vmem>>, %arg7: memref<16x32xf32, #tpu.memory_space<vmem>>, %arg8: memref<32x32xf32, #tpu.memory_space<vmem>>, %arg9: memref<1x32xf32, #tpu.memory_space<vmem>>, %arg10: memref<32x64xf32, #tpu.memory_space<vmem>>, %arg11: memref<1x64xf32, #tpu.memory_space<vmem>>, %arg12: memref<32x32xf32, #tpu.memory_space<vmem>>, %arg13: memref<1x32xf32, #tpu.memory_space<vmem>>, %arg14: memref<1x32xf32, #tpu.memory_space<vmem>>, %arg15: memref<1x32xf32, #tpu.memory_space<vmem>>, %arg16: memref<1x32xf32, #tpu.memory_space<vmem>>, %arg17: memref<1x32xf32, #tpu.memory_space<vmem>>, %arg18: memref<32x64xf32, #tpu.memory_space<vmem>>, %arg19: memref<1x64xf32, #tpu.memory_space<vmem>>, %arg20: memref<64x32xf32, #tpu.memory_space<vmem>>, %arg21: memref<1x32xf32, #tpu.memory_space<vmem>>, %arg22: memref<1x32xf32, #tpu.memory_space<vmem>>, %arg23: memref<1x32xf32, #tpu.memory_space<vmem>>, %arg24: memref<2x8x32xf32, #tpu.memory_space<vmem>>) attributes {dimension_semantics = [], scalar_prefetch = 0 : i64, scratch_operands = 0 : i64, tpu.core_type = #tpu.core_type<tc>} {
    %c0 = arith.constant 0 : index
    %c0_0 = arith.constant 0 : index
    %c0_1 = arith.constant 0 : index
    %0 = vector.load %arg0[%c0, %c0_0, %c0_1] : memref<2x8x32xf32, #tpu.memory_space<vmem>>, vector<2x8x32xf32>
    %1 = vector.shape_cast %0 : vector<2x8x32xf32> to vector<16x32xf32>
    %c0_2 = arith.constant 0 : index
    %c0_3 = arith.constant 0 : index
    %2 = vector.load %arg1[%c0_2, %c0_3] : memref<32x96xf32, #tpu.memory_space<vmem>>, vector<32x96xf32>
    %cst = arith.constant dense<0.000000e+00> : vector<16x96xf32>
    %3 = tpu.matmul %1, %2, %cst {dimension_numbers = #tpu.dot_dimension_numbers<[1], [0], [0], [1], [0, 0, 1, 1], [], []>} : vector<16x32xf32>, vector<32x96xf32>, vector<16x96xf32> -> vector<16x96xf32>
    %c0_4 = arith.constant 0 : index
    %c0_5 = arith.constant 0 : index
    %4 = vector.load %arg2[%c0_4, %c0_5] : memref<1x96xf32, #tpu.memory_space<vmem>>, vector<1x96xf32>
    %5 = vector.broadcast %4 : vector<1x96xf32> to vector<16x96xf32>
    %6 = arith.addf %3, %5 : vector<16x96xf32>
    %7 = vector.extract_strided_slice %6 {offsets = [0, 0], sizes = [16, 32], strides = [1, 1]} : vector<16x96xf32> to vector<16x32xf32>
    %8 = vector.shape_cast %7 : vector<16x32xf32> to vector<2x8x32xf32>
    %9 = vector.extract_strided_slice %6 {offsets = [0, 32], sizes = [16, 32], strides = [1, 1]} : vector<16x96xf32> to vector<16x32xf32>
    %10 = vector.shape_cast %9 : vector<16x32xf32> to vector<2x8x32xf32>
    %11 = vector.extract_strided_slice %6 {offsets = [0, 64], sizes = [16, 32], strides = [1, 1]} : vector<16x96xf32> to vector<16x32xf32>
    %12 = vector.shape_cast %11 : vector<16x32xf32> to vector<2x8x32xf32>
    %c0_6 = arith.constant 0 : index
    %c0_7 = arith.constant 0 : index
    %13 = vector.load %arg3[%c0_6, %c0_7] : memref<32x32xf32, #tpu.memory_space<vmem>>, vector<32x32xf32>
    %c0_8 = arith.constant 0 : index
    %c0_9 = arith.constant 0 : index
    %14 = vector.load %arg4[%c0_8, %c0_9] : memref<1x32xf32, #tpu.memory_space<vmem>>, vector<1x32xf32>
    %15 = vector.extract_strided_slice %8 {offsets = [0, 0, 0], sizes = [2, 8, 8], strides = [1, 1, 1]} : vector<2x8x32xf32> to vector<2x8x8xf32>
    %cst_10 = arith.constant 0.353553385 : f32
    %16 = vector.broadcast %cst_10 : f32 to vector<2x8x8xf32>
    %17 = arith.mulf %15, %16 : vector<2x8x8xf32>
    %18 = vector.extract_strided_slice %10 {offsets = [0, 0, 0], sizes = [2, 8, 8], strides = [1, 1, 1]} : vector<2x8x32xf32> to vector<2x8x8xf32>
    %19 = vector.extract_strided_slice %12 {offsets = [0, 0, 0], sizes = [2, 8, 8], strides = [1, 1, 1]} : vector<2x8x32xf32> to vector<2x8x8xf32>
    "tpu.trace_start"() <{level = 10 : i32, message = "bqd,bkd->bqk"}> : () -> ()
    %cst_11 = arith.constant dense<0.000000e+00> : vector<2x8x8xf32>
    %20 = tpu.matmul %17, %18, %cst_11 {dimension_numbers = #tpu.dot_dimension_numbers<[2], [2], [1], [1], [0, 0, 0, 1, 1, 1], [0], [0]>} : vector<2x8x8xf32>, vector<2x8x8xf32>, vector<2x8x8xf32> -> vector<2x8x8xf32>
    "tpu.trace_stop"() : () -> ()
    %cst_12 = arith.constant dense<0xFF800000> : vector<2x8xf32>
    %21 = vector.multi_reduction <maximumf>, %20, %cst_12 [2] : vector<2x8x8xf32> to vector<2x8xf32>
    %22 = vector.shape_cast %21 : vector<2x8xf32> to vector<2x8x1xf32>
    %23 = vector.broadcast %22 : vector<2x8x1xf32> to vector<2x8x8xf32>
    %24 = arith.subf %20, %23 : vector<2x8x8xf32>
    %25 = math.exp %24 : vector<2x8x8xf32>
    %cst_13 = arith.constant dense<0.000000e+00> : vector<2x8xf32>
    %26 = vector.multi_reduction <add>, %25, %cst_13 [2] : vector<2x8x8xf32> to vector<2x8xf32>
    %27 = vector.shape_cast %26 : vector<2x8xf32> to vector<2x8x1xf32>
    %28 = tpu.reciprocal %27 {approx = true} : vector<2x8x1xf32> -> vector<2x8x1xf32>
    %29 = vector.broadcast %28 : vector<2x8x1xf32> to vector<2x8x8xf32>
    %30 = arith.mulf %25, %29 : vector<2x8x8xf32>
    "tpu.trace_start"() <{level = 10 : i32, message = "bqk,bkd->bqd"}> : () -> ()
    %cst_14 = arith.constant dense<0.000000e+00> : vector<2x8x8xf32>
    %31 = tpu.matmul %30, %19, %cst_14 {dimension_numbers = #tpu.dot_dimension_numbers<[2], [1], [1], [2], [0, 0, 0, 1, 1, 2], [0], [0]>} : vector<2x8x8xf32>, vector<2x8x8xf32>, vector<2x8x8xf32> -> vector<2x8x8xf32>
    "tpu.trace_stop"() : () -> ()
    %32 = vector.extract_strided_slice %8 {offsets = [0, 0, 8], sizes = [2, 8, 8], strides = [1, 1, 1]} : vector<2x8x32xf32> to vector<2x8x8xf32>
    %cst_15 = arith.constant 0.353553385 : f32
    %33 = vector.broadcast %cst_15 : f32 to vector<2x8x8xf32>
    %34 = arith.mulf %32, %33 : vector<2x8x8xf32>
    %35 = vector.extract_strided_slice %10 {offsets = [0, 0, 8], sizes = [2, 8, 8], strides = [1, 1, 1]} : vector<2x8x32xf32> to vector<2x8x8xf32>
    %36 = vector.extract_strided_slice %12 {offsets = [0, 0, 8], sizes = [2, 8, 8], strides = [1, 1, 1]} : vector<2x8x32xf32> to vector<2x8x8xf32>
    "tpu.trace_start"() <{level = 10 : i32, message = "bqd,bkd->bqk"}> : () -> ()
    %cst_16 = arith.constant dense<0.000000e+00> : vector<2x8x8xf32>
    %37 = tpu.matmul %34, %35, %cst_16 {dimension_numbers = #tpu.dot_dimension_numbers<[2], [2], [1], [1], [0, 0, 0, 1, 1, 1], [0], [0]>} : vector<2x8x8xf32>, vector<2x8x8xf32>, vector<2x8x8xf32> -> vector<2x8x8xf32>
    "tpu.trace_stop"() : () -> ()
    %cst_17 = arith.constant dense<0xFF800000> : vector<2x8xf32>
    %38 = vector.multi_reduction <maximumf>, %37, %cst_17 [2] : vector<2x8x8xf32> to vector<2x8xf32>
    %39 = vector.shape_cast %38 : vector<2x8xf32> to vector<2x8x1xf32>
    %40 = vector.broadcast %39 : vector<2x8x1xf32> to vector<2x8x8xf32>
    %41 = arith.subf %37, %40 : vector<2x8x8xf32>
    %42 = math.exp %41 : vector<2x8x8xf32>
    %cst_18 = arith.constant dense<0.000000e+00> : vector<2x8xf32>
    %43 = vector.multi_reduction <add>, %42, %cst_18 [2] : vector<2x8x8xf32> to vector<2x8xf32>
    %44 = vector.shape_cast %43 : vector<2x8xf32> to vector<2x8x1xf32>
    %45 = tpu.reciprocal %44 {approx = true} : vector<2x8x1xf32> -> vector<2x8x1xf32>
    %46 = vector.broadcast %45 : vector<2x8x1xf32> to vector<2x8x8xf32>
    %47 = arith.mulf %42, %46 : vector<2x8x8xf32>
    "tpu.trace_start"() <{level = 10 : i32, message = "bqk,bkd->bqd"}> : () -> ()
    %cst_19 = arith.constant dense<0.000000e+00> : vector<2x8x8xf32>
    %48 = tpu.matmul %47, %36, %cst_19 {dimension_numbers = #tpu.dot_dimension_numbers<[2], [1], [1], [2], [0, 0, 0, 1, 1, 2], [0], [0]>} : vector<2x8x8xf32>, vector<2x8x8xf32>, vector<2x8x8xf32> -> vector<2x8x8xf32>
    "tpu.trace_stop"() : () -> ()
    %49 = vector.extract_strided_slice %8 {offsets = [0, 0, 16], sizes = [2, 8, 8], strides = [1, 1, 1]} : vector<2x8x32xf32> to vector<2x8x8xf32>
    %cst_20 = arith.constant 0.353553385 : f32
    %50 = vector.broadcast %cst_20 : f32 to vector<2x8x8xf32>
    %51 = arith.mulf %49, %50 : vector<2x8x8xf32>
    %52 = vector.extract_strided_slice %10 {offsets = [0, 0, 16], sizes = [2, 8, 8], strides = [1, 1, 1]} : vector<2x8x32xf32> to vector<2x8x8xf32>
    %53 = vector.extract_strided_slice %12 {offsets = [0, 0, 16], sizes = [2, 8, 8], strides = [1, 1, 1]} : vector<2x8x32xf32> to vector<2x8x8xf32>
    "tpu.trace_start"() <{level = 10 : i32, message = "bqd,bkd->bqk"}> : () -> ()
    %cst_21 = arith.constant dense<0.000000e+00> : vector<2x8x8xf32>
    %54 = tpu.matmul %51, %52, %cst_21 {dimension_numbers = #tpu.dot_dimension_numbers<[2], [2], [1], [1], [0, 0, 0, 1, 1, 1], [0], [0]>} : vector<2x8x8xf32>, vector<2x8x8xf32>, vector<2x8x8xf32> -> vector<2x8x8xf32>
    "tpu.trace_stop"() : () -> ()
    %cst_22 = arith.constant dense<0xFF800000> : vector<2x8xf32>
    %55 = vector.multi_reduction <maximumf>, %54, %cst_22 [2] : vector<2x8x8xf32> to vector<2x8xf32>
    %56 = vector.shape_cast %55 : vector<2x8xf32> to vector<2x8x1xf32>
    %57 = vector.broadcast %56 : vector<2x8x1xf32> to vector<2x8x8xf32>
    %58 = arith.subf %54, %57 : vector<2x8x8xf32>
    %59 = math.exp %58 : vector<2x8x8xf32>
    %cst_23 = arith.constant dense<0.000000e+00> : vector<2x8xf32>
    %60 = vector.multi_reduction <add>, %59, %cst_23 [2] : vector<2x8x8xf32> to vector<2x8xf32>
    %61 = vector.shape_cast %60 : vector<2x8xf32> to vector<2x8x1xf32>
    %62 = tpu.reciprocal %61 {approx = true} : vector<2x8x1xf32> -> vector<2x8x1xf32>
    %63 = vector.broadcast %62 : vector<2x8x1xf32> to vector<2x8x8xf32>
    %64 = arith.mulf %59, %63 : vector<2x8x8xf32>
    "tpu.trace_start"() <{level = 10 : i32, message = "bqk,bkd->bqd"}> : () -> ()
    %cst_24 = arith.constant dense<0.000000e+00> : vector<2x8x8xf32>
    %65 = tpu.matmul %64, %53, %cst_24 {dimension_numbers = #tpu.dot_dimension_numbers<[2], [1], [1], [2], [0, 0, 0, 1, 1, 2], [0], [0]>} : vector<2x8x8xf32>, vector<2x8x8xf32>, vector<2x8x8xf32> -> vector<2x8x8xf32>
    "tpu.trace_stop"() : () -> ()
    %66 = vector.extract_strided_slice %8 {offsets = [0, 0, 24], sizes = [2, 8, 8], strides = [1, 1, 1]} : vector<2x8x32xf32> to vector<2x8x8xf32>
    %cst_25 = arith.constant 0.353553385 : f32
    %67 = vector.broadcast %cst_25 : f32 to vector<2x8x8xf32>
    %68 = arith.mulf %66, %67 : vector<2x8x8xf32>
    %69 = vector.extract_strided_slice %10 {offsets = [0, 0, 24], sizes = [2, 8, 8], strides = [1, 1, 1]} : vector<2x8x32xf32> to vector<2x8x8xf32>
    %70 = vector.extract_strided_slice %12 {offsets = [0, 0, 24], sizes = [2, 8, 8], strides = [1, 1, 1]} : vector<2x8x32xf32> to vector<2x8x8xf32>
    "tpu.trace_start"() <{level = 10 : i32, message = "bqd,bkd->bqk"}> : () -> ()
    %cst_26 = arith.constant dense<0.000000e+00> : vector<2x8x8xf32>
    %71 = tpu.matmul %68, %69, %cst_26 {dimension_numbers = #tpu.dot_dimension_numbers<[2], [2], [1], [1], [0, 0, 0, 1, 1, 1], [0], [0]>} : vector<2x8x8xf32>, vector<2x8x8xf32>, vector<2x8x8xf32> -> vector<2x8x8xf32>
    "tpu.trace_stop"() : () -> ()
    %cst_27 = arith.constant dense<0xFF800000> : vector<2x8xf32>
    %72 = vector.multi_reduction <maximumf>, %71, %cst_27 [2] : vector<2x8x8xf32> to vector<2x8xf32>
    %73 = vector.shape_cast %72 : vector<2x8xf32> to vector<2x8x1xf32>
    %74 = vector.broadcast %73 : vector<2x8x1xf32> to vector<2x8x8xf32>
    %75 = arith.subf %71, %74 : vector<2x8x8xf32>
    %76 = math.exp %75 : vector<2x8x8xf32>
    %cst_28 = arith.constant dense<0.000000e+00> : vector<2x8xf32>
    %77 = vector.multi_reduction <add>, %76, %cst_28 [2] : vector<2x8x8xf32> to vector<2x8xf32>
    %78 = vector.shape_cast %77 : vector<2x8xf32> to vector<2x8x1xf32>
    %79 = tpu.reciprocal %78 {approx = true} : vector<2x8x1xf32> -> vector<2x8x1xf32>
    %80 = vector.broadcast %79 : vector<2x8x1xf32> to vector<2x8x8xf32>
    %81 = arith.mulf %76, %80 : vector<2x8x8xf32>
    "tpu.trace_start"() <{level = 10 : i32, message = "bqk,bkd->bqd"}> : () -> ()
    %cst_29 = arith.constant dense<0.000000e+00> : vector<2x8x8xf32>
    %82 = tpu.matmul %81, %70, %cst_29 {dimension_numbers = #tpu.dot_dimension_numbers<[2], [1], [1], [2], [0, 0, 0, 1, 1, 2], [0], [0]>} : vector<2x8x8xf32>, vector<2x8x8xf32>, vector<2x8x8xf32> -> vector<2x8x8xf32>
    "tpu.trace_stop"() : () -> ()
    %83 = tpu.concatenate %31, %48, %65, %82 in 2 : vector<2x8x8xf32>, vector<2x8x8xf32>, vector<2x8x8xf32>, vector<2x8x8xf32> -> vector<2x8x32xf32>
    %84 = vector.shape_cast %83 : vector<2x8x32xf32> to vector<16x32xf32>
    %cst_30 = arith.constant dense<0.000000e+00> : vector<16x32xf32>
    %85 = tpu.matmul %84, %13, %cst_30 {dimension_numbers = #tpu.dot_dimension_numbers<[1], [0], [0], [1], [0, 0, 1, 1], [], []>} : vector<16x32xf32>, vector<32x32xf32>, vector<16x32xf32> -> vector<16x32xf32>
    %86 = vector.broadcast %14 : vector<1x32xf32> to vector<16x32xf32>
    %87 = arith.addf %85, %86 : vector<16x32xf32>
    %88 = arith.addf %1, %87 : vector<16x32xf32>
    %c0_31 = arith.constant 0 : index
    %c0_32 = arith.constant 0 : index
    %89 = vector.load %arg5[%c0_31, %c0_32] : memref<1x32xf32, #tpu.memory_space<vmem>>, vector<1x32xf32>
    %c0_33 = arith.constant 0 : index
    %c0_34 = arith.constant 0 : index
    %90 = vector.load %arg6[%c0_33, %c0_34] : memref<1x32xf32, #tpu.memory_space<vmem>>, vector<1x32xf32>
    %cst_35 = arith.constant dense<0.000000e+00> : vector<16xf32>
    %91 = vector.multi_reduction <add>, %88, %cst_35 [1] : vector<16x32xf32> to vector<16xf32>
    %92 = vector.shape_cast %91 : vector<16xf32> to vector<16x1xf32>
    %cst_36 = arith.constant 3.200000e+01 : f32
    %93 = vector.broadcast %cst_36 : f32 to vector<16x1xf32>
    %94 = arith.divf %92, %93 : vector<16x1xf32>
    %95 = arith.mulf %88, %88 : vector<16x32xf32>
    %cst_37 = arith.constant dense<0.000000e+00> : vector<16xf32>
    %96 = vector.multi_reduction <add>, %95, %cst_37 [1] : vector<16x32xf32> to vector<16xf32>
    %97 = vector.shape_cast %96 : vector<16xf32> to vector<16x1xf32>
    %cst_38 = arith.constant 3.200000e+01 : f32
    %98 = vector.broadcast %cst_38 : f32 to vector<16x1xf32>
    %99 = arith.divf %97, %98 : vector<16x1xf32>
    %100 = arith.mulf %94, %94 : vector<16x1xf32>
    %101 = arith.subf %99, %100 : vector<16x1xf32>
    %102 = vector.broadcast %94 : vector<16x1xf32> to vector<16x32xf32>
    %103 = arith.subf %88, %102 : vector<16x32xf32>
    %cst_39 = arith.constant 9.99999974E-6 : f32
    %104 = vector.broadcast %cst_39 : f32 to vector<16x1xf32>
    %105 = arith.addf %101, %104 : vector<16x1xf32>
    %106 = math.rsqrt %105 : vector<16x1xf32>
    %107 = vector.broadcast %106 : vector<16x1xf32> to vector<16x32xf32>
    %108 = arith.mulf %103, %107 : vector<16x32xf32>
    %109 = vector.broadcast %89 : vector<1x32xf32> to vector<16x32xf32>
    %110 = arith.mulf %108, %109 : vector<16x32xf32>
    %111 = vector.broadcast %90 : vector<1x32xf32> to vector<16x32xf32>
    %112 = arith.addf %110, %111 : vector<16x32xf32>
    %c0_40 = arith.constant 0 : index
    %c0_41 = arith.constant 0 : index
    %113 = vector.load %arg7[%c0_40, %c0_41] : memref<16x32xf32, #tpu.memory_space<vmem>>, vector<16x32xf32>
    %c0_42 = arith.constant 0 : index
    %c0_43 = arith.constant 0 : index
    %114 = vector.load %arg8[%c0_42, %c0_43] : memref<32x32xf32, #tpu.memory_space<vmem>>, vector<32x32xf32>
    %cst_44 = arith.constant dense<0.000000e+00> : vector<16x32xf32>
    %115 = tpu.matmul %113, %114, %cst_44 {dimension_numbers = #tpu.dot_dimension_numbers<[1], [0], [0], [1], [0, 0, 1, 1], [], []>} : vector<16x32xf32>, vector<32x32xf32>, vector<16x32xf32> -> vector<16x32xf32>
    %c0_45 = arith.constant 0 : index
    %c0_46 = arith.constant 0 : index
    %116 = vector.load %arg9[%c0_45, %c0_46] : memref<1x32xf32, #tpu.memory_space<vmem>>, vector<1x32xf32>
    %117 = vector.broadcast %116 : vector<1x32xf32> to vector<16x32xf32>
    %118 = arith.addf %115, %117 : vector<16x32xf32>
    %119 = vector.shape_cast %118 : vector<16x32xf32> to vector<1x16x32xf32>
    %120 = vector.shape_cast %119 : vector<1x16x32xf32> to vector<1x16x32xf32>
    %121 = vector.broadcast %120 : vector<1x16x32xf32> to vector<2x16x32xf32>
    %c0_47 = arith.constant 0 : index
    %c0_48 = arith.constant 0 : index
    %122 = vector.load %arg10[%c0_47, %c0_48] : memref<32x64xf32, #tpu.memory_space<vmem>>, vector<32x64xf32>
    %cst_49 = arith.constant dense<0.000000e+00> : vector<16x64xf32>
    %123 = tpu.matmul %112, %122, %cst_49 {dimension_numbers = #tpu.dot_dimension_numbers<[1], [0], [0], [1], [0, 0, 1, 1], [], []>} : vector<16x32xf32>, vector<32x64xf32>, vector<16x64xf32> -> vector<16x64xf32>
    %c0_50 = arith.constant 0 : index
    %c0_51 = arith.constant 0 : index
    %124 = vector.load %arg11[%c0_50, %c0_51] : memref<1x64xf32, #tpu.memory_space<vmem>>, vector<1x64xf32>
    %125 = vector.broadcast %124 : vector<1x64xf32> to vector<16x64xf32>
    %126 = arith.addf %123, %125 : vector<16x64xf32>
    %127 = vector.extract_strided_slice %126 {offsets = [0, 0], sizes = [16, 32], strides = [1, 1]} : vector<16x64xf32> to vector<16x32xf32>
    %128 = vector.shape_cast %127 : vector<16x32xf32> to vector<2x8x32xf32>
    %129 = vector.extract_strided_slice %126 {offsets = [0, 32], sizes = [16, 32], strides = [1, 1]} : vector<16x64xf32> to vector<16x32xf32>
    %130 = vector.shape_cast %129 : vector<16x32xf32> to vector<2x8x32xf32>
    %c0_52 = arith.constant 0 : index
    %c0_53 = arith.constant 0 : index
    %131 = vector.load %arg12[%c0_52, %c0_53] : memref<32x32xf32, #tpu.memory_space<vmem>>, vector<32x32xf32>
    %c0_54 = arith.constant 0 : index
    %c0_55 = arith.constant 0 : index
    %132 = vector.load %arg13[%c0_54, %c0_55] : memref<1x32xf32, #tpu.memory_space<vmem>>, vector<1x32xf32>
    %133 = vector.extract_strided_slice %121 {offsets = [0, 0, 0], sizes = [2, 16, 8], strides = [1, 1, 1]} : vector<2x16x32xf32> to vector<2x16x8xf32>
    %cst_56 = arith.constant 0.353553385 : f32
    %134 = vector.broadcast %cst_56 : f32 to vector<2x16x8xf32>
    %135 = arith.mulf %133, %134 : vector<2x16x8xf32>
    %136 = vector.extract_strided_slice %128 {offsets = [0, 0, 0], sizes = [2, 8, 8], strides = [1, 1, 1]} : vector<2x8x32xf32> to vector<2x8x8xf32>
    %137 = vector.extract_strided_slice %130 {offsets = [0, 0, 0], sizes = [2, 8, 8], strides = [1, 1, 1]} : vector<2x8x32xf32> to vector<2x8x8xf32>
    "tpu.trace_start"() <{level = 10 : i32, message = "bqd,bkd->bqk"}> : () -> ()
    %cst_57 = arith.constant dense<0.000000e+00> : vector<2x16x8xf32>
    %138 = tpu.matmul %135, %136, %cst_57 {dimension_numbers = #tpu.dot_dimension_numbers<[2], [2], [1], [1], [0, 0, 0, 1, 1, 1], [0], [0]>} : vector<2x16x8xf32>, vector<2x8x8xf32>, vector<2x16x8xf32> -> vector<2x16x8xf32>
    "tpu.trace_stop"() : () -> ()
    %cst_58 = arith.constant dense<0xFF800000> : vector<2x16xf32>
    %139 = vector.multi_reduction <maximumf>, %138, %cst_58 [2] : vector<2x16x8xf32> to vector<2x16xf32>
    %140 = vector.shape_cast %139 : vector<2x16xf32> to vector<2x16x1xf32>
    %141 = vector.broadcast %140 : vector<2x16x1xf32> to vector<2x16x8xf32>
    %142 = arith.subf %138, %141 : vector<2x16x8xf32>
    %143 = math.exp %142 : vector<2x16x8xf32>
    %cst_59 = arith.constant dense<0.000000e+00> : vector<2x16xf32>
    %144 = vector.multi_reduction <add>, %143, %cst_59 [2] : vector<2x16x8xf32> to vector<2x16xf32>
    %145 = vector.shape_cast %144 : vector<2x16xf32> to vector<2x16x1xf32>
    %146 = tpu.reciprocal %145 {approx = true} : vector<2x16x1xf32> -> vector<2x16x1xf32>
    %147 = vector.broadcast %146 : vector<2x16x1xf32> to vector<2x16x8xf32>
    %148 = arith.mulf %143, %147 : vector<2x16x8xf32>
    "tpu.trace_start"() <{level = 10 : i32, message = "bqk,bkd->bqd"}> : () -> ()
    %cst_60 = arith.constant dense<0.000000e+00> : vector<2x16x8xf32>
    %149 = tpu.matmul %148, %137, %cst_60 {dimension_numbers = #tpu.dot_dimension_numbers<[2], [1], [1], [2], [0, 0, 0, 1, 1, 2], [0], [0]>} : vector<2x16x8xf32>, vector<2x8x8xf32>, vector<2x16x8xf32> -> vector<2x16x8xf32>
    "tpu.trace_stop"() : () -> ()
    %150 = vector.extract_strided_slice %121 {offsets = [0, 0, 8], sizes = [2, 16, 8], strides = [1, 1, 1]} : vector<2x16x32xf32> to vector<2x16x8xf32>
    %cst_61 = arith.constant 0.353553385 : f32
    %151 = vector.broadcast %cst_61 : f32 to vector<2x16x8xf32>
    %152 = arith.mulf %150, %151 : vector<2x16x8xf32>
    %153 = vector.extract_strided_slice %128 {offsets = [0, 0, 8], sizes = [2, 8, 8], strides = [1, 1, 1]} : vector<2x8x32xf32> to vector<2x8x8xf32>
    %154 = vector.extract_strided_slice %130 {offsets = [0, 0, 8], sizes = [2, 8, 8], strides = [1, 1, 1]} : vector<2x8x32xf32> to vector<2x8x8xf32>
    "tpu.trace_start"() <{level = 10 : i32, message = "bqd,bkd->bqk"}> : () -> ()
    %cst_62 = arith.constant dense<0.000000e+00> : vector<2x16x8xf32>
    %155 = tpu.matmul %152, %153, %cst_62 {dimension_numbers = #tpu.dot_dimension_numbers<[2], [2], [1], [1], [0, 0, 0, 1, 1, 1], [0], [0]>} : vector<2x16x8xf32>, vector<2x8x8xf32>, vector<2x16x8xf32> -> vector<2x16x8xf32>
    "tpu.trace_stop"() : () -> ()
    %cst_63 = arith.constant dense<0xFF800000> : vector<2x16xf32>
    %156 = vector.multi_reduction <maximumf>, %155, %cst_63 [2] : vector<2x16x8xf32> to vector<2x16xf32>
    %157 = vector.shape_cast %156 : vector<2x16xf32> to vector<2x16x1xf32>
    %158 = vector.broadcast %157 : vector<2x16x1xf32> to vector<2x16x8xf32>
    %159 = arith.subf %155, %158 : vector<2x16x8xf32>
    %160 = math.exp %159 : vector<2x16x8xf32>
    %cst_64 = arith.constant dense<0.000000e+00> : vector<2x16xf32>
    %161 = vector.multi_reduction <add>, %160, %cst_64 [2] : vector<2x16x8xf32> to vector<2x16xf32>
    %162 = vector.shape_cast %161 : vector<2x16xf32> to vector<2x16x1xf32>
    %163 = tpu.reciprocal %162 {approx = true} : vector<2x16x1xf32> -> vector<2x16x1xf32>
    %164 = vector.broadcast %163 : vector<2x16x1xf32> to vector<2x16x8xf32>
    %165 = arith.mulf %160, %164 : vector<2x16x8xf32>
    "tpu.trace_start"() <{level = 10 : i32, message = "bqk,bkd->bqd"}> : () -> ()
    %cst_65 = arith.constant dense<0.000000e+00> : vector<2x16x8xf32>
    %166 = tpu.matmul %165, %154, %cst_65 {dimension_numbers = #tpu.dot_dimension_numbers<[2], [1], [1], [2], [0, 0, 0, 1, 1, 2], [0], [0]>} : vector<2x16x8xf32>, vector<2x8x8xf32>, vector<2x16x8xf32> -> vector<2x16x8xf32>
    "tpu.trace_stop"() : () -> ()
    %167 = vector.extract_strided_slice %121 {offsets = [0, 0, 16], sizes = [2, 16, 8], strides = [1, 1, 1]} : vector<2x16x32xf32> to vector<2x16x8xf32>
    %cst_66 = arith.constant 0.353553385 : f32
    %168 = vector.broadcast %cst_66 : f32 to vector<2x16x8xf32>
    %169 = arith.mulf %167, %168 : vector<2x16x8xf32>
    %170 = vector.extract_strided_slice %128 {offsets = [0, 0, 16], sizes = [2, 8, 8], strides = [1, 1, 1]} : vector<2x8x32xf32> to vector<2x8x8xf32>
    %171 = vector.extract_strided_slice %130 {offsets = [0, 0, 16], sizes = [2, 8, 8], strides = [1, 1, 1]} : vector<2x8x32xf32> to vector<2x8x8xf32>
    "tpu.trace_start"() <{level = 10 : i32, message = "bqd,bkd->bqk"}> : () -> ()
    %cst_67 = arith.constant dense<0.000000e+00> : vector<2x16x8xf32>
    %172 = tpu.matmul %169, %170, %cst_67 {dimension_numbers = #tpu.dot_dimension_numbers<[2], [2], [1], [1], [0, 0, 0, 1, 1, 1], [0], [0]>} : vector<2x16x8xf32>, vector<2x8x8xf32>, vector<2x16x8xf32> -> vector<2x16x8xf32>
    "tpu.trace_stop"() : () -> ()
    %cst_68 = arith.constant dense<0xFF800000> : vector<2x16xf32>
    %173 = vector.multi_reduction <maximumf>, %172, %cst_68 [2] : vector<2x16x8xf32> to vector<2x16xf32>
    %174 = vector.shape_cast %173 : vector<2x16xf32> to vector<2x16x1xf32>
    %175 = vector.broadcast %174 : vector<2x16x1xf32> to vector<2x16x8xf32>
    %176 = arith.subf %172, %175 : vector<2x16x8xf32>
    %177 = math.exp %176 : vector<2x16x8xf32>
    %cst_69 = arith.constant dense<0.000000e+00> : vector<2x16xf32>
    %178 = vector.multi_reduction <add>, %177, %cst_69 [2] : vector<2x16x8xf32> to vector<2x16xf32>
    %179 = vector.shape_cast %178 : vector<2x16xf32> to vector<2x16x1xf32>
    %180 = tpu.reciprocal %179 {approx = true} : vector<2x16x1xf32> -> vector<2x16x1xf32>
    %181 = vector.broadcast %180 : vector<2x16x1xf32> to vector<2x16x8xf32>
    %182 = arith.mulf %177, %181 : vector<2x16x8xf32>
    "tpu.trace_start"() <{level = 10 : i32, message = "bqk,bkd->bqd"}> : () -> ()
    %cst_70 = arith.constant dense<0.000000e+00> : vector<2x16x8xf32>
    %183 = tpu.matmul %182, %171, %cst_70 {dimension_numbers = #tpu.dot_dimension_numbers<[2], [1], [1], [2], [0, 0, 0, 1, 1, 2], [0], [0]>} : vector<2x16x8xf32>, vector<2x8x8xf32>, vector<2x16x8xf32> -> vector<2x16x8xf32>
    "tpu.trace_stop"() : () -> ()
    %184 = vector.extract_strided_slice %121 {offsets = [0, 0, 24], sizes = [2, 16, 8], strides = [1, 1, 1]} : vector<2x16x32xf32> to vector<2x16x8xf32>
    %cst_71 = arith.constant 0.353553385 : f32
    %185 = vector.broadcast %cst_71 : f32 to vector<2x16x8xf32>
    %186 = arith.mulf %184, %185 : vector<2x16x8xf32>
    %187 = vector.extract_strided_slice %128 {offsets = [0, 0, 24], sizes = [2, 8, 8], strides = [1, 1, 1]} : vector<2x8x32xf32> to vector<2x8x8xf32>
    %188 = vector.extract_strided_slice %130 {offsets = [0, 0, 24], sizes = [2, 8, 8], strides = [1, 1, 1]} : vector<2x8x32xf32> to vector<2x8x8xf32>
    "tpu.trace_start"() <{level = 10 : i32, message = "bqd,bkd->bqk"}> : () -> ()
    %cst_72 = arith.constant dense<0.000000e+00> : vector<2x16x8xf32>
    %189 = tpu.matmul %186, %187, %cst_72 {dimension_numbers = #tpu.dot_dimension_numbers<[2], [2], [1], [1], [0, 0, 0, 1, 1, 1], [0], [0]>} : vector<2x16x8xf32>, vector<2x8x8xf32>, vector<2x16x8xf32> -> vector<2x16x8xf32>
    "tpu.trace_stop"() : () -> ()
    %cst_73 = arith.constant dense<0xFF800000> : vector<2x16xf32>
    %190 = vector.multi_reduction <maximumf>, %189, %cst_73 [2] : vector<2x16x8xf32> to vector<2x16xf32>
    %191 = vector.shape_cast %190 : vector<2x16xf32> to vector<2x16x1xf32>
    %192 = vector.broadcast %191 : vector<2x16x1xf32> to vector<2x16x8xf32>
    %193 = arith.subf %189, %192 : vector<2x16x8xf32>
    %194 = math.exp %193 : vector<2x16x8xf32>
    %cst_74 = arith.constant dense<0.000000e+00> : vector<2x16xf32>
    %195 = vector.multi_reduction <add>, %194, %cst_74 [2] : vector<2x16x8xf32> to vector<2x16xf32>
    %196 = vector.shape_cast %195 : vector<2x16xf32> to vector<2x16x1xf32>
    %197 = tpu.reciprocal %196 {approx = true} : vector<2x16x1xf32> -> vector<2x16x1xf32>
    %198 = vector.broadcast %197 : vector<2x16x1xf32> to vector<2x16x8xf32>
    %199 = arith.mulf %194, %198 : vector<2x16x8xf32>
    "tpu.trace_start"() <{level = 10 : i32, message = "bqk,bkd->bqd"}> : () -> ()
    %cst_75 = arith.constant dense<0.000000e+00> : vector<2x16x8xf32>
    %200 = tpu.matmul %199, %188, %cst_75 {dimension_numbers = #tpu.dot_dimension_numbers<[2], [1], [1], [2], [0, 0, 0, 1, 1, 2], [0], [0]>} : vector<2x16x8xf32>, vector<2x8x8xf32>, vector<2x16x8xf32> -> vector<2x16x8xf32>
    "tpu.trace_stop"() : () -> ()
    %201 = tpu.concatenate %149, %166, %183, %200 in 2 : vector<2x16x8xf32>, vector<2x16x8xf32>, vector<2x16x8xf32>, vector<2x16x8xf32> -> vector<2x16x32xf32>
    %202 = vector.shape_cast %201 : vector<2x16x32xf32> to vector<32x32xf32>
    %cst_76 = arith.constant dense<0.000000e+00> : vector<32x32xf32>
    %203 = tpu.matmul %202, %131, %cst_76 {dimension_numbers = #tpu.dot_dimension_numbers<[1], [0], [0], [1], [0, 0, 1, 1], [], []>} : vector<32x32xf32>, vector<32x32xf32>, vector<32x32xf32> -> vector<32x32xf32>
    %204 = vector.broadcast %132 : vector<1x32xf32> to vector<32x32xf32>
    %205 = arith.addf %203, %204 : vector<32x32xf32>
    %c0_77 = arith.constant 0 : index
    %c0_78 = arith.constant 0 : index
    %206 = vector.load %arg14[%c0_77, %c0_78] : memref<1x32xf32, #tpu.memory_space<vmem>>, vector<1x32xf32>
    %c0_79 = arith.constant 0 : index
    %c0_80 = arith.constant 0 : index
    %207 = vector.load %arg15[%c0_79, %c0_80] : memref<1x32xf32, #tpu.memory_space<vmem>>, vector<1x32xf32>
    %cst_81 = arith.constant dense<0.000000e+00> : vector<32xf32>
    %208 = vector.multi_reduction <add>, %205, %cst_81 [1] : vector<32x32xf32> to vector<32xf32>
    %209 = vector.shape_cast %208 : vector<32xf32> to vector<32x1xf32>
    %cst_82 = arith.constant 3.200000e+01 : f32
    %210 = vector.broadcast %cst_82 : f32 to vector<32x1xf32>
    %211 = arith.divf %209, %210 : vector<32x1xf32>
    %212 = arith.mulf %205, %205 : vector<32x32xf32>
    %cst_83 = arith.constant dense<0.000000e+00> : vector<32xf32>
    %213 = vector.multi_reduction <add>, %212, %cst_83 [1] : vector<32x32xf32> to vector<32xf32>
    %214 = vector.shape_cast %213 : vector<32xf32> to vector<32x1xf32>
    %cst_84 = arith.constant 3.200000e+01 : f32
    %215 = vector.broadcast %cst_84 : f32 to vector<32x1xf32>
    %216 = arith.divf %214, %215 : vector<32x1xf32>
    %217 = arith.mulf %211, %211 : vector<32x1xf32>
    %218 = arith.subf %216, %217 : vector<32x1xf32>
    %219 = vector.broadcast %211 : vector<32x1xf32> to vector<32x32xf32>
    %220 = arith.subf %205, %219 : vector<32x32xf32>
    %cst_85 = arith.constant 9.99999974E-6 : f32
    %221 = vector.broadcast %cst_85 : f32 to vector<32x1xf32>
    %222 = arith.addf %218, %221 : vector<32x1xf32>
    %223 = math.rsqrt %222 : vector<32x1xf32>
    %224 = vector.broadcast %223 : vector<32x1xf32> to vector<32x32xf32>
    %225 = arith.mulf %220, %224 : vector<32x32xf32>
    %226 = vector.broadcast %206 : vector<1x32xf32> to vector<32x32xf32>
    %227 = arith.mulf %225, %226 : vector<32x32xf32>
    %228 = vector.broadcast %207 : vector<1x32xf32> to vector<32x32xf32>
    %229 = arith.addf %227, %228 : vector<32x32xf32>
    %230 = vector.shape_cast %229 : vector<32x32xf32> to vector<2x16x32xf32>
    %cst_86 = arith.constant dense<0.000000e+00> : vector<2x32xf32>
    %231 = vector.multi_reduction <add>, %230, %cst_86 [1] : vector<2x16x32xf32> to vector<2x32xf32>
    %232 = vector.shape_cast %231 : vector<2x32xf32> to vector<2x1x32xf32>
    %cst_87 = arith.constant 1.600000e+01 : f32
    %233 = vector.broadcast %cst_87 : f32 to vector<2x1x32xf32>
    %234 = arith.divf %232, %233 : vector<2x1x32xf32>
    %235 = vector.shape_cast %112 : vector<16x32xf32> to vector<2x8x32xf32>
    %236 = vector.broadcast %234 : vector<2x1x32xf32> to vector<2x8x32xf32>
    %237 = arith.addf %235, %236 : vector<2x8x32xf32>
    %238 = vector.shape_cast %237 : vector<2x8x32xf32> to vector<16x32xf32>
    %c0_88 = arith.constant 0 : index
    %c0_89 = arith.constant 0 : index
    %239 = vector.load %arg16[%c0_88, %c0_89] : memref<1x32xf32, #tpu.memory_space<vmem>>, vector<1x32xf32>
    %c0_90 = arith.constant 0 : index
    %c0_91 = arith.constant 0 : index
    %240 = vector.load %arg17[%c0_90, %c0_91] : memref<1x32xf32, #tpu.memory_space<vmem>>, vector<1x32xf32>
    %cst_92 = arith.constant dense<0.000000e+00> : vector<16xf32>
    %241 = vector.multi_reduction <add>, %238, %cst_92 [1] : vector<16x32xf32> to vector<16xf32>
    %242 = vector.shape_cast %241 : vector<16xf32> to vector<16x1xf32>
    %cst_93 = arith.constant 3.200000e+01 : f32
    %243 = vector.broadcast %cst_93 : f32 to vector<16x1xf32>
    %244 = arith.divf %242, %243 : vector<16x1xf32>
    %245 = arith.mulf %238, %238 : vector<16x32xf32>
    %cst_94 = arith.constant dense<0.000000e+00> : vector<16xf32>
    %246 = vector.multi_reduction <add>, %245, %cst_94 [1] : vector<16x32xf32> to vector<16xf32>
    %247 = vector.shape_cast %246 : vector<16xf32> to vector<16x1xf32>
    %cst_95 = arith.constant 3.200000e+01 : f32
    %248 = vector.broadcast %cst_95 : f32 to vector<16x1xf32>
    %249 = arith.divf %247, %248 : vector<16x1xf32>
    %250 = arith.mulf %244, %244 : vector<16x1xf32>
    %251 = arith.subf %249, %250 : vector<16x1xf32>
    %252 = vector.broadcast %244 : vector<16x1xf32> to vector<16x32xf32>
    %253 = arith.subf %238, %252 : vector<16x32xf32>
    %cst_96 = arith.constant 9.99999974E-6 : f32
    %254 = vector.broadcast %cst_96 : f32 to vector<16x1xf32>
    %255 = arith.addf %251, %254 : vector<16x1xf32>
    %256 = math.rsqrt %255 : vector<16x1xf32>
    %257 = vector.broadcast %256 : vector<16x1xf32> to vector<16x32xf32>
    %258 = arith.mulf %253, %257 : vector<16x32xf32>
    %259 = vector.broadcast %239 : vector<1x32xf32> to vector<16x32xf32>
    %260 = arith.mulf %258, %259 : vector<16x32xf32>
    %261 = vector.broadcast %240 : vector<1x32xf32> to vector<16x32xf32>
    %262 = arith.addf %260, %261 : vector<16x32xf32>
    %c0_97 = arith.constant 0 : index
    %c0_98 = arith.constant 0 : index
    %263 = vector.load %arg18[%c0_97, %c0_98] : memref<32x64xf32, #tpu.memory_space<vmem>>, vector<32x64xf32>
    %cst_99 = arith.constant dense<0.000000e+00> : vector<16x64xf32>
    %264 = tpu.matmul %262, %263, %cst_99 {dimension_numbers = #tpu.dot_dimension_numbers<[1], [0], [0], [1], [0, 0, 1, 1], [], []>} : vector<16x32xf32>, vector<32x64xf32>, vector<16x64xf32> -> vector<16x64xf32>
    %c0_100 = arith.constant 0 : index
    %c0_101 = arith.constant 0 : index
    %265 = vector.load %arg19[%c0_100, %c0_101] : memref<1x64xf32, #tpu.memory_space<vmem>>, vector<1x64xf32>
    %266 = vector.broadcast %265 : vector<1x64xf32> to vector<16x64xf32>
    %267 = arith.addf %264, %266 : vector<16x64xf32>
    %cst_102 = arith.constant 0.000000e+00 : f32
    %268 = vector.broadcast %cst_102 : f32 to vector<16x64xf32>
    %269 = arith.maximumf %267, %268 : vector<16x64xf32>
    %c0_103 = arith.constant 0 : index
    %c0_104 = arith.constant 0 : index
    %270 = vector.load %arg20[%c0_103, %c0_104] : memref<64x32xf32, #tpu.memory_space<vmem>>, vector<64x32xf32>
    %cst_105 = arith.constant dense<0.000000e+00> : vector<16x32xf32>
    %271 = tpu.matmul %269, %270, %cst_105 {dimension_numbers = #tpu.dot_dimension_numbers<[1], [0], [0], [1], [0, 0, 1, 1], [], []>} : vector<16x64xf32>, vector<64x32xf32>, vector<16x32xf32> -> vector<16x32xf32>
    %c0_106 = arith.constant 0 : index
    %c0_107 = arith.constant 0 : index
    %272 = vector.load %arg21[%c0_106, %c0_107] : memref<1x32xf32, #tpu.memory_space<vmem>>, vector<1x32xf32>
    %273 = vector.broadcast %272 : vector<1x32xf32> to vector<16x32xf32>
    %274 = arith.addf %271, %273 : vector<16x32xf32>
    %275 = arith.addf %262, %274 : vector<16x32xf32>
    %c0_108 = arith.constant 0 : index
    %c0_109 = arith.constant 0 : index
    %276 = vector.load %arg22[%c0_108, %c0_109] : memref<1x32xf32, #tpu.memory_space<vmem>>, vector<1x32xf32>
    %c0_110 = arith.constant 0 : index
    %c0_111 = arith.constant 0 : index
    %277 = vector.load %arg23[%c0_110, %c0_111] : memref<1x32xf32, #tpu.memory_space<vmem>>, vector<1x32xf32>
    %cst_112 = arith.constant dense<0.000000e+00> : vector<16xf32>
    %278 = vector.multi_reduction <add>, %275, %cst_112 [1] : vector<16x32xf32> to vector<16xf32>
    %279 = vector.shape_cast %278 : vector<16xf32> to vector<16x1xf32>
    %cst_113 = arith.constant 3.200000e+01 : f32
    %280 = vector.broadcast %cst_113 : f32 to vector<16x1xf32>
    %281 = arith.divf %279, %280 : vector<16x1xf32>
    %282 = arith.mulf %275, %275 : vector<16x32xf32>
    %cst_114 = arith.constant dense<0.000000e+00> : vector<16xf32>
    %283 = vector.multi_reduction <add>, %282, %cst_114 [1] : vector<16x32xf32> to vector<16xf32>
    %284 = vector.shape_cast %283 : vector<16xf32> to vector<16x1xf32>
    %cst_115 = arith.constant 3.200000e+01 : f32
    %285 = vector.broadcast %cst_115 : f32 to vector<16x1xf32>
    %286 = arith.divf %284, %285 : vector<16x1xf32>
    %287 = arith.mulf %281, %281 : vector<16x1xf32>
    %288 = arith.subf %286, %287 : vector<16x1xf32>
    %289 = vector.broadcast %281 : vector<16x1xf32> to vector<16x32xf32>
    %290 = arith.subf %275, %289 : vector<16x32xf32>
    %cst_116 = arith.constant 9.99999974E-6 : f32
    %291 = vector.broadcast %cst_116 : f32 to vector<16x1xf32>
    %292 = arith.addf %288, %291 : vector<16x1xf32>
    %293 = math.rsqrt %292 : vector<16x1xf32>
    %294 = vector.broadcast %293 : vector<16x1xf32> to vector<16x32xf32>
    %295 = arith.mulf %290, %294 : vector<16x32xf32>
    %296 = vector.broadcast %276 : vector<1x32xf32> to vector<16x32xf32>
    %297 = arith.mulf %295, %296 : vector<16x32xf32>
    %298 = vector.broadcast %277 : vector<1x32xf32> to vector<16x32xf32>
    %299 = arith.addf %297, %298 : vector<16x32xf32>
    %300 = vector.shape_cast %299 : vector<16x32xf32> to vector<2x8x32xf32>
    %c0_117 = arith.constant 0 : index
    %c0_118 = arith.constant 0 : index
    %c0_119 = arith.constant 0 : index
    %301 = vector.load %arg24[%c0_117, %c0_118, %c0_119] : memref<2x8x32xf32, #tpu.memory_space<vmem>>, vector<2x8x32xf32>
    tpu.vector_store %arg24[%c0_117, %c0_118, %c0_119], %300 {strides = array<i32>} : memref<2x8x32xf32, #tpu.memory_space<vmem>>, vector<2x8x32xf32>,
    return
  }
}

</mosaic_0001>

<llo_original>
// kernel: tpu_custom_call.1
$region0: #{tpu_custom_call.1}
  #allocation0 [shape = 'u32[]', space=smem, size = 0x4, offset = 0x4, fixed_abs, tag = 'smem constant byte address 0x4 - core index']
  #allocation1 [shape = 'u32[72,128]{1,0:T(1,128)}', space=vmem, size = 0x9000, scoped, tag = 'internal scratch']
  %s0 = inlined_call_operand.hbm [shape: f32[2,8,32], index: 0, kind: input, shape index: {}]
  %s1 = inlined_call_operand.vmem [shape: f32[32,96], index: 1, kind: input, shape index: {}]
  %s2 = inlined_call_operand.vmem [shape: f32[1,96], index: 2, kind: input, shape index: {}]
  %s3 = inlined_call_operand.vmem [shape: f32[32,32], index: 3, kind: input, shape index: {}]
  %s4 = inlined_call_operand.vmem [shape: f32[1,32], index: 4, kind: input, shape index: {}]
  %s5 = inlined_call_operand.vmem [shape: f32[1,32], index: 5, kind: input, shape index: {}]
  %s6 = inlined_call_operand.vmem [shape: f32[1,32], index: 6, kind: input, shape index: {}]
  %s7 = inlined_call_operand.hbm [shape: f32[16,32], index: 7, kind: input, shape index: {}]
  %s8 = inlined_call_operand.vmem [shape: f32[32,32], index: 8, kind: input, shape index: {}]
  %s9 = inlined_call_operand.vmem [shape: f32[1,32], index: 9, kind: input, shape index: {}]
  %s10 = inlined_call_operand.hbm [shape: f32[32,64], index: 10, kind: input, shape index: {}]
  %s11 = inlined_call_operand.vmem [shape: f32[1,64], index: 11, kind: input, shape index: {}]
  %s12 = inlined_call_operand.hbm [shape: f32[32,32], index: 12, kind: input, shape index: {}]
  %s13 = inlined_call_operand.vmem [shape: f32[1,32], index: 13, kind: input, shape index: {}]
  %s14 = inlined_call_operand.vmem [shape: f32[1,32], index: 14, kind: input, shape index: {}]
  %s15 = inlined_call_operand.vmem [shape: f32[1,32], index: 15, kind: input, shape index: {}]
  %s16 = inlined_call_operand.vmem [shape: f32[1,32], index: 16, kind: input, shape index: {}]
  %s17 = inlined_call_operand.vmem [shape: f32[1,32], index: 17, kind: input, shape index: {}]
  %s18 = inlined_call_operand.hbm [shape: f32[32,64], index: 18, kind: input, shape index: {}]
  %s19 = inlined_call_operand.vmem [shape: f32[1,64], index: 19, kind: input, shape index: {}]
  %s20 = inlined_call_operand.vmem [shape: f32[64,32], index: 20, kind: input, shape index: {}]
  %s21 = inlined_call_operand.vmem [shape: f32[1,32], index: 21, kind: input, shape index: {}]
  %s22 = inlined_call_operand.vmem [shape: f32[1,32], index: 22, kind: input, shape index: {}]
  %s23 = inlined_call_operand.vmem [shape: f32[1,32], index: 23, kind: input, shape index: {}]
  %s24 = inlined_call_operand.hbm [shape: f32[2,8,32], index: 24, kind: output, shape index: {}]
  %s25 = sld [smem:[#allocation0]]
  $region126: #{tpu_custom_call.1} parent=0
    _
  %s27 = ssub.s32 1, %s25
  %s28 = scalar_select 0, %s27, %s25
  $region1: #{tpu_custom_call.1} parent=0
    #allocation2 [shape = 'u8[8192]{0}', space=vmem, size = 0x2000, scoped, tag = 'input window, operand 0, single buffered']
    #allocation3 [shape = 's32[1]{0}', space=sflag, size = 0x4, scoped, tag = 'scoped memory for tpu_custom_call.1']
    #allocation4 [shape = 's32[1]{0}', space=sflag, size = 0x4, scoped, tag = 'scoped memory for tpu_custom_call.1']
    #allocation5 [shape = 'u8[8192]{0}', space=vmem, size = 0x2000, scoped, tag = 'input window, operand 7, single buffered']
    #allocation6 [shape = 's32[1]{0}', space=sflag, size = 0x4, scoped, tag = 'scoped memory for tpu_custom_call.1']
    #allocation7 [shape = 'u8[16384]{0}', space=vmem, size = 0x4000, scoped, tag = 'input window, operand 10, single buffered']
    #allocation8 [shape = 'u8[16384]{0}', space=vmem, size = 0x4000, scoped, tag = 'input window, operand 12, single buffered']
    #allocation9 [shape = 's32[1]{0}', space=sflag, size = 0x4, scoped, tag = 'scoped memory for tpu_custom_call.1']
    #allocation10 [shape = 'u8[16384]{0}', space=vmem, size = 0x4000, scoped, tag = 'input window, operand 18, single buffered']
    #allocation11 [shape = 'u8[8192]{0}', space=vmem, size = 0x2000, scoped, tag = 'output window, operand 0, single buffered']
    %29 = vsyncpa [#allocation3], 0
    %30 = vsyncpa [#allocation6], 0
    %31 = vsyncpa [#allocation9], 0
    %32 = vsyncpa [#allocation4], 0
    // Predicated region
    $region2: #{tpu_custom_call.1} parent=1 // pred_check
      _
    $region3: #{tpu_custom_call.1} parent=1 // pred_check_branch
      %34 = sbr.rel (0) target = $region5
    $region4: #{tpu_custom_call.1} parent=1 // pred_region
      %36 = vsyncadd [#allocation3], 0
      %s37 = sshll.u32 %s0, 4
      %s38 = int_to_ptr.hbm [resolvable:$true] %s37
      %s39 = sshll.u32 [#allocation2], 4
      %s40 = int_to_ptr.vmem [resolvable:$true] %s39
      %45 = dma.hbm_to_vmem [thread:$0]  %s38, 256, %s40, [#allocation3], 128, 128, 8
    $region5: #{tpu_custom_call.1} parent=1 // pred_fallthru
      _
    // Predicated region
    $region6: #{tpu_custom_call.1} parent=1 // pred_check
      _
    $region7: #{tpu_custom_call.1} parent=1 // pred_check_branch
      %47 = sbr.rel (0) target = $region9
    $region8: #{tpu_custom_call.1} parent=1 // pred_region
      _
    $region9: #{tpu_custom_call.1} parent=1 // pred_fallthru
      _
    // Predicated region
    $region10: #{tpu_custom_call.1} parent=1 // pred_check
      _
    $region11: #{tpu_custom_call.1} parent=1 // pred_check_branch
      %49 = sbr.rel (0) target = $region13
    $region12: #{tpu_custom_call.1} parent=1 // pred_region
      _
    $region13: #{tpu_custom_call.1} parent=1 // pred_fallthru
      _
    // Predicated region
    $region14: #{tpu_custom_call.1} parent=1 // pred_check
      _
    $region15: #{tpu_custom_call.1} parent=1 // pred_check_branch
      %51 = sbr.rel (0) target = $region17
    $region16: #{tpu_custom_call.1} parent=1 // pred_region
      _
    $region17: #{tpu_custom_call.1} parent=1 // pred_fallthru
      _
    // Predicated region
    $region18: #{tpu_custom_call.1} parent=1 // pred_check
      _
    $region19: #{tpu_custom_call.1} parent=1 // pred_check_branch
      %53 = sbr.rel (0) target = $region21
    $region20: #{tpu_custom_call.1} parent=1 // pred_region
      _
    $region21: #{tpu_custom_call.1} parent=1 // pred_fallthru
      _
    // Predicated region
    $region22: #{tpu_custom_call.1} parent=1 // pred_check
      _
    $region23: #{tpu_custom_call.1} parent=1 // pred_check_branch
      %55 = sbr.rel (0) target = $region25
    $region24: #{tpu_custom_call.1} parent=1 // pred_region
      _
    $region25: #{tpu_custom_call.1} parent=1 // pred_fallthru
      _
    // Predicated region
    $region26: #{tpu_custom_call.1} parent=1 // pred_check
      _
    $region27: #{tpu_custom_call.1} parent=1 // pred_check_branch
      %57 = sbr.rel (0) target = $region29
    $region28: #{tpu_custom_call.1} parent=1 // pred_region
      _
    $region29: #{tpu_custom_call.1} parent=1 // pred_fallthru
      _
    // Predicated region
    $region30: #{tpu_custom_call.1} parent=1 // pred_check
      _
    $region31: #{tpu_custom_call.1} parent=1 // pred_check_branch
      %59 = sbr.rel (0) target = $region33
    $region32: #{tpu_custom_call.1} parent=1 // pred_region
      %61 = vsyncadd [#allocation6], 0
      %s62 = sshll.u32 %s7, 4
      %s63 = int_to_ptr.hbm [resolvable:$true] %s62
      %s64 = sshll.u32 [#allocation5], 4
      %s65 = int_to_ptr.vmem [resolvable:$true] %s64
      %70 = dma.hbm_to_vmem [thread:$0]  %s63, 256, %s65, [#allocation6], 128, 128, 8
    $region33: #{tpu_custom_call.1} parent=1 // pred_fallthru
      _
    // Predicated region
    $region34: #{tpu_custom_call.1} parent=1 // pred_check
      _
    $region35: #{tpu_custom_call.1} parent=1 // pred_check_branch
      %72 = sbr.rel (0) target = $region37
    $region36: #{tpu_custom_call.1} parent=1 // pred_region
      _
    $region37: #{tpu_custom_call.1} parent=1 // pred_fallthru
      _
    // Predicated region
    $region38: #{tpu_custom_call.1} parent=1 // pred_check
      _
    $region39: #{tpu_custom_call.1} parent=1 // pred_check_branch
      %74 = sbr.rel (0) target = $region41
    $region40: #{tpu_custom_call.1} parent=1 // pred_region
      _
    $region41: #{tpu_custom_call.1} parent=1 // pred_fallthru
      _
    // Predicated region
    $region42: #{tpu_custom_call.1} parent=1 // pred_check
      _
    $region43: #{tpu_custom_call.1} parent=1 // pred_check_branch
      %76 = sbr.rel (0) target = $region45
    $region44: #{tpu_custom_call.1} parent=1 // pred_region
      %78 = vsyncadd [#allocation6], 0
      %s79 = sshll.u32 %s10, 4
      %s80 = int_to_ptr.hbm [resolvable:$true] %s79
      %s81 = sshll.u32 [#allocation7], 4
      %s82 = int_to_ptr.vmem [resolvable:$true] %s81
      %87 = dma.hbm_to_vmem [thread:$0]  %s80, 512, %s82, [#allocation6], 128, 128, 8
    $region45: #{tpu_custom_call.1} parent=1 // pred_fallthru
      _
    // Predicated region
    $region46: #{tpu_custom_call.1} parent=1 // pred_check
      _
    $region47: #{tpu_custom_call.1} parent=1 // pred_check_branch
      %89 = sbr.rel (0) target = $region49
    $region48: #{tpu_custom_call.1} parent=1 // pred_region
      _
    $region49: #{tpu_custom_call.1} parent=1 // pred_fallthru
      _
    // Predicated region
    $region50: #{tpu_custom_call.1} parent=1 // pred_check
      _
    $region51: #{tpu_custom_call.1} parent=1 // pred_check_branch
      %91 = sbr.rel (0) target = $region53
    $region52: #{tpu_custom_call.1} parent=1 // pred_region
      %93 = vsyncadd [#allocation9], 0
      %s94 = sshll.u32 %s12, 4
      %s95 = int_to_ptr.hbm [resolvable:$true] %s94
      %s96 = sshll.u32 [#allocation8], 4
      %s97 = int_to_ptr.vmem [resolvable:$true] %s96
      %102 = dma.hbm_to_vmem [thread:$0]  %s95, 512, %s97, [#allocation9], 128, 128, 8
    $region53: #{tpu_custom_call.1} parent=1 // pred_fallthru
      _
    // Predicated region
    $region54: #{tpu_custom_call.1} parent=1 // pred_check
      _
    $region55: #{tpu_custom_call.1} parent=1 // pred_check_branch
      %104 = sbr.rel (0) target = $region57
    $region56: #{tpu_custom_call.1} parent=1 // pred_region
      _
    $region57: #{tpu_custom_call.1} parent=1 // pred_fallthru
      _
    // Predicated region
    $region58: #{tpu_custom_call.1} parent=1 // pred_check
      _
    $region59: #{tpu_custom_call.1} parent=1 // pred_check_branch
      %106 = sbr.rel (0) target = $region61
    $region60: #{tpu_custom_call.1} parent=1 // pred_region
      _
    $region61: #{tpu_custom_call.1} parent=1 // pred_fallthru
      _
    // Predicated region
    $region62: #{tpu_custom_call.1} parent=1 // pred_check
      _
    $region63: #{tpu_custom_call.1} parent=1 // pred_check_branch
      %108 = sbr.rel (0) target = $region65
    $region64: #{tpu_custom_call.1} parent=1 // pred_region
      _
    $region65: #{tpu_custom_call.1} parent=1 // pred_fallthru
      _
    // Predicated region
    $region66: #{tpu_custom_call.1} parent=1 // pred_check
      _
    $region67: #{tpu_custom_call.1} parent=1 // pred_check_branch
      %110 = sbr.rel (0) target = $region69
    $region68: #{tpu_custom_call.1} parent=1 // pred_region
      _
    $region69: #{tpu_custom_call.1} parent=1 // pred_fallthru
      _
    // Predicated region
    $region70: #{tpu_custom_call.1} parent=1 // pred_check
      _
    $region71: #{tpu_custom_call.1} parent=1 // pred_check_branch
      %112 = sbr.rel (0) target = $region73
    $region72: #{tpu_custom_call.1} parent=1 // pred_region
      _
    $region73: #{tpu_custom_call.1} parent=1 // pred_fallthru
      _
    // Predicated region
    $region74: #{tpu_custom_call.1} parent=1 // pred_check
      _
    $region75: #{tpu_custom_call.1} parent=1 // pred_check_branch
      %114 = sbr.rel (0) target = $region77
    $region76: #{tpu_custom_call.1} parent=1 // pred_region
      %116 = vsyncadd [#allocation9], 0
      %s117 = sshll.u32 %s18, 4
      %s118 = int_to_ptr.hbm [resolvable:$true] %s117
      %s119 = sshll.u32 [#allocation10], 4
      %s120 = int_to_ptr.vmem [resolvable:$true] %s119
      %125 = dma.hbm_to_vmem [thread:$0]  %s118, 512, %s120, [#allocation9], 128, 128, 8
    $region77: #{tpu_custom_call.1} parent=1 // pred_fallthru
      _
    // Predicated region
    $region78: #{tpu_custom_call.1} parent=1 // pred_check
      _
    $region79: #{tpu_custom_call.1} parent=1 // pred_check_branch
      %127 = sbr.rel (0) target = $region81
    $region80: #{tpu_custom_call.1} parent=1 // pred_region
      _
    $region81: #{tpu_custom_call.1} parent=1 // pred_fallthru
      _
    // Predicated region
    $region82: #{tpu_custom_call.1} parent=1 // pred_check
      _
    $region83: #{tpu_custom_call.1} parent=1 // pred_check_branch
      %129 = sbr.rel (0) target = $region85
    $region84: #{tpu_custom_call.1} parent=1 // pred_region
      _
    $region85: #{tpu_custom_call.1} parent=1 // pred_fallthru
      _
    // Predicated region
    $region86: #{tpu_custom_call.1} parent=1 // pred_check
      _
    $region87: #{tpu_custom_call.1} parent=1 // pred_check_branch
      %131 = sbr.rel (0) target = $region89
    $region88: #{tpu_custom_call.1} parent=1 // pred_region
      _
    $region89: #{tpu_custom_call.1} parent=1 // pred_fallthru
      _
    // Predicated region
    $region90: #{tpu_custom_call.1} parent=1 // pred_check
      _
    $region91: #{tpu_custom_call.1} parent=1 // pred_check_branch
      %133 = sbr.rel (0) target = $region93
    $region92: #{tpu_custom_call.1} parent=1 // pred_region
      _
    $region93: #{tpu_custom_call.1} parent=1 // pred_fallthru
      _
    // Predicated region
    $region94: #{tpu_custom_call.1} parent=1 // pred_check
      _
    $region95: #{tpu_custom_call.1} parent=1 // pred_check_branch
      %135 = sbr.rel (0) target = $region97
    $region96: #{tpu_custom_call.1} parent=1 // pred_region
      _
    $region97: #{tpu_custom_call.1} parent=1 // pred_fallthru
      _
    // Predicated region
    $region98: #{tpu_custom_call.1} parent=1 // pred_check
      _
    $region99: #{tpu_custom_call.1} parent=1 // pred_check_branch
      %137 = sbr.rel (0) target = $region101
    $region100: #{tpu_custom_call.1} parent=1 // pred_region
      %139 = dma.done [#allocation3], 256
    $region101: #{tpu_custom_call.1} parent=1 // pred_fallthru
      _
    // Predicated region
    $region102: #{tpu_custom_call.1} parent=1 // pred_check
      _
    $region103: #{tpu_custom_call.1} parent=1 // pred_check_branch
      %141 = sbr.rel (0) target = $region105
    $region104: #{tpu_custom_call.1} parent=1 // pred_region
      %143 = dma.done [#allocation6], 256
    $region105: #{tpu_custom_call.1} parent=1 // pred_fallthru
      _
    // Predicated region
    $region106: #{tpu_custom_call.1} parent=1 // pred_check
      _
    $region107: #{tpu_custom_call.1} parent=1 // pred_check_branch
      %145 = sbr.rel (0) target = $region109
    $region108: #{tpu_custom_call.1} parent=1 // pred_region
      %147 = dma.done [#allocation6], 512
    $region109: #{tpu_custom_call.1} parent=1 // pred_fallthru
      _
    // Predicated region
    $region110: #{tpu_custom_call.1} parent=1 // pred_check
      _
    $region111: #{tpu_custom_call.1} parent=1 // pred_check_branch
      %149 = sbr.rel (0) target = $region113
    $region112: #{tpu_custom_call.1} parent=1 // pred_region
      %151 = dma.done [#allocation9], 512
    $region113: #{tpu_custom_call.1} parent=1 // pred_fallthru
      _
    // Predicated region
    $region114: #{tpu_custom_call.1} parent=1 // pred_check
      _
    $region115: #{tpu_custom_call.1} parent=1 // pred_check_branch
      %153 = sbr.rel (0) target = $region117
    $region116: #{tpu_custom_call.1} parent=1 // pred_region
      %155 = dma.done [#allocation9], 512
    $region117: #{tpu_custom_call.1} parent=1 // pred_fallthru
      _
    %v156 = vld [vmem:[#allocation2] sm:$0xff]
    %v157 = vld [vmem:[#allocation2 + $0x8] sm:$0xff]
    %v158 = vld [vmem:[%s1] sm:$0xff]
    %v159 = vld [vmem:[%s1 + $0x8] sm:$0xff]
    %v160 = vld [vmem:[%s1 + $0x10] sm:$0xff]
    %v161 = vld [vmem:[%s1 + $0x18] sm:$0xff]
    %v162 = vld [vmem:[%s2] sm:$0x1]
    %v164 = vperm.slane %v162, 0
    %vm166 = vcmask 261120
    %v168 = vsel %vm166, %v156, 0
    %v171 = vsel %vm166, %v157, 0
    %173 = vmatpush.msra.mxu0 0.0
    %174 = vmatpush.msra.mxu0 0.0
    %175 = vmatpush.msra.mxu0 0.0
    %176 = vmatpush.msra.mxu0 0.0
    %177 = vmatpush.msra.mxu0 0.0
    %178 = vmatpush.msra.mxu0 0.0
    %179 = vmatpush.msra.mxu0 0.0
    %180 = vmatpush.msra.mxu0 0.0
    %181 = vmatpush.msra.mxu0 0.0
    %182 = vmatpush.msra.mxu0 0.0
    %183 = vmatpush.msra.mxu0 0.0
    %184 = vmatpush.msra.mxu0 0.0
    %185 = vmatpush.msra.mxu0 %v161
    %186 = vmatpush.msra.mxu0 %v160
    %187 = vmatpush.msra.mxu0 %v159
    %188 = vmatpush.msra.mxu0 %v158
    %189 = vmatmul.f32.gmra.mxu0 %v168
    %v190 = vpop.f32.mrf.mxu0
    %v191 = vadd.f32 %v164, %v190
    %192 = vmatmul.f32.gmra.mxu0 %v171
    %v193 = vpop.f32.mrf.mxu0
    %v194 = vadd.f32 %v164, %v193
    %195 = vdwg.mxu0
    %v196 = vld [vmem:[%s3] sm:$0xff]
    %v197 = vld [vmem:[%s3 + $0x8] sm:$0xff]
    %v198 = vld [vmem:[%s3 + $0x10] sm:$0xff]
    %v199 = vld [vmem:[%s3 + $0x18] sm:$0xff]
    %v200 = vld [vmem:[%s4] sm:$0x1]
    %v201 = vmul.f32 %v191, 0.35355338
    %v202 = vmul.f32 %v194, 0.35355338
    %204 = vrot.lane.b32.xlu0 %v191, 96
    %v205 = vpop.permute.xlu0 %204
    %vm206 = vcmask 64512
    %v208 = vsel %vm206, %v201, 0
    %v210 = vsel %vm206, %v205, 0
    %212 = vmatpush.xpose.msra.mxu0 0.0
    %213 = vmatpush.xpose.msra.mxu0 0.0
    %214 = vmatpush.xpose.msra.mxu0 0.0
    %215 = vmatpush.xpose.msra.mxu0 0.0
    %216 = vmatpush.xpose.msra.mxu0 0.0
    %217 = vmatpush.xpose.msra.mxu0 0.0
    %218 = vmatpush.xpose.msra.mxu0 0.0
    %219 = vmatpush.xpose.msra.mxu0 0.0
    %220 = vmatpush.xpose.msra.mxu0 0.0
    %221 = vmatpush.xpose.msra.mxu0 0.0
    %222 = vmatpush.xpose.msra.mxu0 0.0
    %223 = vmatpush.xpose.msra.mxu0 0.0
    %224 = vmatpush.xpose.msra.mxu0 0.0
    %225 = vmatpush.xpose.msra.mxu0 0.0
    %226 = vmatpush.xpose.msra.mxu0 0.0
    %227 = vmatpush.xpose.msra.mxu0 %v210
    %228 = vmatmul.f32.gmra.mxu0 %v208
    %v229 = vpop.f32.mrf.mxu0
    %v230 = vadd.f32 0.0, %v229
    %231 = vdwg.mxu0
    %233 = vrot.lane.b32.xlu0 %v194, 96
    %v234 = vpop.permute.xlu0 %233
    %v236 = vsel %vm206, %v202, 0
    %v238 = vsel %vm206, %v234, 0
    %240 = vmatpush.xpose.msra.mxu0 0.0
    %241 = vmatpush.xpose.msra.mxu0 0.0
    %242 = vmatpush.xpose.msra.mxu0 0.0
    %243 = vmatpush.xpose.msra.mxu0 0.0
    %244 = vmatpush.xpose.msra.mxu0 0.0
    %245 = vmatpush.xpose.msra.mxu0 0.0
    %246 = vmatpush.xpose.msra.mxu0 0.0
    %247 = vmatpush.xpose.msra.mxu0 0.0
    %248 = vmatpush.xpose.msra.mxu0 0.0
    %249 = vmatpush.xpose.msra.mxu0 0.0
    %250 = vmatpush.xpose.msra.mxu0 0.0
    %251 = vmatpush.xpose.msra.mxu0 0.0
    %252 = vmatpush.xpose.msra.mxu0 0.0
    %253 = vmatpush.xpose.msra.mxu0 0.0
    %254 = vmatpush.xpose.msra.mxu0 0.0
    %255 = vmatpush.xpose.msra.mxu0 %v238
    %256 = vmatmul.f32.gmra.mxu0 %v236
    %v257 = vpop.f32.mrf.mxu0
    %v258 = vadd.f32 0.0, %v257
    %259 = vdwg.mxu0
    %v260 = vsel %vm206, %v230, -inf
    %261 = vmax.xlane.f32.xlu0 %v260
    %v262 = vpop.xlane.xlu0 %261
    %v263 = vsel %vm206, %v258, -inf
    %264 = vmax.xlane.f32.xlu0 %v263
    %v265 = vpop.xlane.xlu0 %264
    %v266 = vsub.f32 %v230, %v262
    %v267 = vsub.f32 %v258, %v265
    %v268 = vmul.f32 %v266, 1.442695
    %v269 = vpow.pop %v268
    %v270 = vmul.f32 %v267, 1.442695
    %v271 = vpow.pop %v270
    %v272 = vsel %vm206, %v269, 0.0
    %273 = vadd.xlane.f32.xlu0 %v272
    %v274 = vpop.xlane.xlu0 %273
    %v275 = vsel %vm206, %v271, 0.0
    %276 = vadd.xlane.f32.xlu0 %v275
    %v277 = vpop.xlane.xlu0 %276
    %v278 = vrcp.pop %v274
    %v279 = vrcp.pop %v277
    %v280 = vmul.f32 %v269, %v278
    %v281 = vmul.f32 %v271, %v279
    %282 = vrot.lane.b32.xlu0 %v191, 64
    %v283 = vpop.permute.xlu0 %282
    %v286 = vsel %vm206, %v280, 0
    %288 = vmatpush.msra.mxu0 0.0
    %289 = vmatpush.msra.mxu0 0.0
    %290 = vmatpush.msra.mxu0 0.0
    %291 = vmatpush.msra.mxu0 0.0
    %292 = vmatpush.msra.mxu0 0.0
    %293 = vmatpush.msra.mxu0 0.0
    %294 = vmatpush.msra.mxu0 0.0
    %295 = vmatpush.msra.mxu0 0.0
    %296 = vmatpush.msra.mxu0 0.0
    %297 = vmatpush.msra.mxu0 0.0
    %298 = vmatpush.msra.mxu0 0.0
    %299 = vmatpush.msra.mxu0 0.0
    %300 = vmatpush.msra.mxu0 0.0
    %301 = vmatpush.msra.mxu0 0.0
    %302 = vmatpush.msra.mxu0 0.0
    %303 = vmatpush.msra.mxu0 %v283
    %304 = vmatmul.f32.gmra.mxu0 %v286
    %v305 = vpop.f32.mrf.mxu0
    %v306 = vadd.f32 0.0, %v305
    %307 = vdwg.mxu0
    %308 = vrot.lane.b32.xlu0 %v194, 64
    %v309 = vpop.permute.xlu0 %308
    %v312 = vsel %vm206, %v281, 0
    %314 = vmatpush.msra.mxu0 0.0
    %315 = vmatpush.msra.mxu0 0.0
    %316 = vmatpush.msra.mxu0 0.0
    %317 = vmatpush.msra.mxu0 0.0
    %318 = vmatpush.msra.mxu0 0.0
    %319 = vmatpush.msra.mxu0 0.0
    %320 = vmatpush.msra.mxu0 0.0
    %321 = vmatpush.msra.mxu0 0.0
    %322 = vmatpush.msra.mxu0 0.0
    %323 = vmatpush.msra.mxu0 0.0
    %324 = vmatpush.msra.mxu0 0.0
    %325 = vmatpush.msra.mxu0 0.0
    %326 = vmatpush.msra.mxu0 0.0
    %327 = vmatpush.msra.mxu0 0.0
    %328 = vmatpush.msra.mxu0 0.0
    %329 = vmatpush.msra.mxu0 %v309
    %330 = vmatmul.f32.gmra.mxu0 %v312
    %v331 = vpop.f32.mrf.mxu0
    %v332 = vadd.f32 0.0, %v331
    %333 = vdwg.mxu0
    %334 = vrot.lane.b32.xlu0 %v201, 120
    %v335 = vpop.permute.xlu0 %334
    %336 = vrot.lane.b32.xlu0 %v191, 88
    %v337 = vpop.permute.xlu0 %336
    %v338 = vsel %vm206, %v335, 0
    %v340 = vsel %vm206, %v337, 0
    %342 = vmatpush.xpose.msra.mxu0 0.0
    %343 = vmatpush.xpose.msra.mxu0 0.0
    %344 = vmatpush.xpose.msra.mxu0 0.0
    %345 = vmatpush.xpose.msra.mxu0 0.0
    %346 = vmatpush.xpose.msra.mxu0 0.0
    %347 = vmatpush.xpose.msra.mxu0 0.0
    %348 = vmatpush.xpose.msra.mxu0 0.0
    %349 = vmatpush.xpose.msra.mxu0 0.0
    %350 = vmatpush.xpose.msra.mxu0 0.0
    %351 = vmatpush.xpose.msra.mxu0 0.0
    %352 = vmatpush.xpose.msra.mxu0 0.0
    %353 = vmatpush.xpose.msra.mxu0 0.0
    %354 = vmatpush.xpose.msra.mxu0 0.0
    %355 = vmatpush.xpose.msra.mxu0 0.0
    %356 = vmatpush.xpose.msra.mxu0 0.0
    %357 = vmatpush.xpose.msra.mxu0 %v340
    %358 = vmatmul.f32.gmra.mxu0 %v338
    %v359 = vpop.f32.mrf.mxu0
    %v360 = vadd.f32 0.0, %v359
    %361 = vdwg.mxu0
    %362 = vrot.lane.b32.xlu0 %v202, 120
    %v363 = vpop.permute.xlu0 %362
    %364 = vrot.lane.b32.xlu0 %v194, 88
    %v365 = vpop.permute.xlu0 %364
    %v366 = vsel %vm206, %v363, 0
    %v368 = vsel %vm206, %v365, 0
    %370 = vmatpush.xpose.msra.mxu0 0.0
    %371 = vmatpush.xpose.msra.mxu0 0.0
    %372 = vmatpush.xpose.msra.mxu0 0.0
    %373 = vmatpush.xpose.msra.mxu0 0.0
    %374 = vmatpush.xpose.msra.mxu0 0.0
    %375 = vmatpush.xpose.msra.mxu0 0.0
    %376 = vmatpush.xpose.msra.mxu0 0.0
    %377 = vmatpush.xpose.msra.mxu0 0.0
    %378 = vmatpush.xpose.msra.mxu0 0.0
    %379 = vmatpush.xpose.msra.mxu0 0.0
    %380 = vmatpush.xpose.msra.mxu0 0.0
    %381 = vmatpush.xpose.msra.mxu0 0.0
    %382 = vmatpush.xpose.msra.mxu0 0.0
    %383 = vmatpush.xpose.msra.mxu0 0.0
    %384 = vmatpush.xpose.msra.mxu0 0.0
    %385 = vmatpush.xpose.msra.mxu0 %v368
    %386 = vmatmul.f32.gmra.mxu0 %v366
    %v387 = vpop.f32.mrf.mxu0
    %v388 = vadd.f32 0.0, %v387
    %389 = vdwg.mxu0
    %v390 = vsel %vm206, %v360, -inf
    %391 = vmax.xlane.f32.xlu0 %v390
    %v392 = vpop.xlane.xlu0 %391
    %v393 = vsel %vm206, %v388, -inf
    %394 = vmax.xlane.f32.xlu0 %v393
    %v395 = vpop.xlane.xlu0 %394
    %v396 = vsub.f32 %v360, %v392
    %v397 = vsub.f32 %v388, %v395
    %v398 = vmul.f32 %v396, 1.442695
    %v399 = vpow.pop %v398
    %v400 = vmul.f32 %v397, 1.442695
    %v401 = vpow.pop %v400
    %v402 = vsel %vm206, %v399, 0.0
    %403 = vadd.xlane.f32.xlu0 %v402
    %v404 = vpop.xlane.xlu0 %403
    %v405 = vsel %vm206, %v401, 0.0
    %406 = vadd.xlane.f32.xlu0 %v405
    %v407 = vpop.xlane.xlu0 %406
    %v408 = vrcp.pop %v404
    %v409 = vrcp.pop %v407
    %v410 = vmul.f32 %v399, %v408
    %v411 = vmul.f32 %v401, %v409
    %412 = vrot.lane.b32.xlu0 %v191, 56
    %v413 = vpop.permute.xlu0 %412
    %v416 = vsel %vm206, %v410, 0
    %418 = vmatpush.msra.mxu0 0.0
    %419 = vmatpush.msra.mxu0 0.0
    %420 = vmatpush.msra.mxu0 0.0
    %421 = vmatpush.msra.mxu0 0.0
    %422 = vmatpush.msra.mxu0 0.0
    %423 = vmatpush.msra.mxu0 0.0
    %424 = vmatpush.msra.mxu0 0.0
    %425 = vmatpush.msra.mxu0 0.0
    %426 = vmatpush.msra.mxu0 0.0
    %427 = vmatpush.msra.mxu0 0.0
    %428 = vmatpush.msra.mxu0 0.0
    %429 = vmatpush.msra.mxu0 0.0
    %430 = vmatpush.msra.mxu0 0.0
    %431 = vmatpush.msra.mxu0 0.0
    %432 = vmatpush.msra.mxu0 0.0
    %433 = vmatpush.msra.mxu0 %v413
    %434 = vmatmul.f32.gmra.mxu0 %v416
    %v435 = vpop.f32.mrf.mxu0
    %v436 = vadd.f32 0.0, %v435
    %437 = vdwg.mxu0
    %438 = vrot.lane.b32.xlu0 %v194, 56
    %v439 = vpop.permute.xlu0 %438
    %v442 = vsel %vm206, %v411, 0
    %444 = vmatpush.msra.mxu0 0.0
    %445 = vmatpush.msra.mxu0 0.0
    %446 = vmatpush.msra.mxu0 0.0
    %447 = vmatpush.msra.mxu0 0.0
    %448 = vmatpush.msra.mxu0 0.0
    %449 = vmatpush.msra.mxu0 0.0
    %450 = vmatpush.msra.mxu0 0.0
    %451 = vmatpush.msra.mxu0 0.0
    %452 = vmatpush.msra.mxu0 0.0
    %453 = vmatpush.msra.mxu0 0.0
    %454 = vmatpush.msra.mxu0 0.0
    %455 = vmatpush.msra.mxu0 0.0
    %456 = vmatpush.msra.mxu0 0.0
    %457 = vmatpush.msra.mxu0 0.0
    %458 = vmatpush.msra.mxu0 0.0
    %459 = vmatpush.msra.mxu0 %v439
    %460 = vmatmul.f32.gmra.mxu0 %v442
    %v461 = vpop.f32.mrf.mxu0
    %v462 = vadd.f32 0.0, %v461
    %463 = vdwg.mxu0
    %464 = vrot.lane.b32.xlu0 %v201, 112
    %v465 = vpop.permute.xlu0 %464
    %466 = vrot.lane.b32.xlu0 %v191, 80
    %v467 = vpop.permute.xlu0 %466
    %v468 = vsel %vm206, %v465, 0
    %v470 = vsel %vm206, %v467, 0
    %472 = vmatpush.xpose.msra.mxu0 0.0
    %473 = vmatpush.xpose.msra.mxu0 0.0
    %474 = vmatpush.xpose.msra.mxu0 0.0
    %475 = vmatpush.xpose.msra.mxu0 0.0
    %476 = vmatpush.xpose.msra.mxu0 0.0
    %477 = vmatpush.xpose.msra.mxu0 0.0
    %478 = vmatpush.xpose.msra.mxu0 0.0
    %479 = vmatpush.xpose.msra.mxu0 0.0
    %480 = vmatpush.xpose.msra.mxu0 0.0
    %481 = vmatpush.xpose.msra.mxu0 0.0
    %482 = vmatpush.xpose.msra.mxu0 0.0
    %483 = vmatpush.xpose.msra.mxu0 0.0
    %484 = vmatpush.xpose.msra.mxu0 0.0
    %485 = vmatpush.xpose.msra.mxu0 0.0
    %486 = vmatpush.xpose.msra.mxu0 0.0
    %487 = vmatpush.xpose.msra.mxu0 %v470
    %488 = vmatmul.f32.gmra.mxu0 %v468
    %v489 = vpop.f32.mrf.mxu0
    %v490 = vadd.f32 0.0, %v489
    %491 = vdwg.mxu0
    %492 = vrot.lane.b32.xlu0 %v202, 112
    %v493 = vpop.permute.xlu0 %492
    %494 = vrot.lane.b32.xlu0 %v194, 80
    %v495 = vpop.permute.xlu0 %494
    %v496 = vsel %vm206, %v493, 0
    %v498 = vsel %vm206, %v495, 0
    %500 = vmatpush.xpose.msra.mxu0 0.0
    %501 = vmatpush.xpose.msra.mxu0 0.0
    %502 = vmatpush.xpose.msra.mxu0 0.0
    %503 = vmatpush.xpose.msra.mxu0 0.0
    %504 = vmatpush.xpose.msra.mxu0 0.0
    %505 = vmatpush.xpose.msra.mxu0 0.0
    %506 = vmatpush.xpose.msra.mxu0 0.0
    %507 = vmatpush.xpose.msra.mxu0 0.0
    %508 = vmatpush.xpose.msra.mxu0 0.0
    %509 = vmatpush.xpose.msra.mxu0 0.0
    %510 = vmatpush.xpose.msra.mxu0 0.0
    %511 = vmatpush.xpose.msra.mxu0 0.0
    %512 = vmatpush.xpose.msra.mxu0 0.0
    %513 = vmatpush.xpose.msra.mxu0 0.0
    %514 = vmatpush.xpose.msra.mxu0 0.0
    %515 = vmatpush.xpose.msra.mxu0 %v498
    %516 = vmatmul.f32.gmra.mxu0 %v496
    %v517 = vpop.f32.mrf.mxu0
    %v518 = vadd.f32 0.0, %v517
    %519 = vdwg.mxu0
    %v520 = vsel %vm206, %v490, -inf
    %521 = vmax.xlane.f32.xlu0 %v520
    %v522 = vpop.xlane.xlu0 %521
    %v523 = vsel %vm206, %v518, -inf
    %524 = vmax.xlane.f32.xlu0 %v523
    %v525 = vpop.xlane.xlu0 %524
    %v526 = vsub.f32 %v490, %v522
    %v527 = vsub.f32 %v518, %v525
    %v528 = vmul.f32 %v526, 1.442695
    %v529 = vpow.pop %v528
    %v530 = vmul.f32 %v527, 1.442695
    %v531 = vpow.pop %v530
    %v532 = vsel %vm206, %v529, 0.0
    %533 = vadd.xlane.f32.xlu0 %v532
    %v534 = vpop.xlane.xlu0 %533
    %v535 = vsel %vm206, %v531, 0.0
    %536 = vadd.xlane.f32.xlu0 %v535
    %v537 = vpop.xlane.xlu0 %536
    %v538 = vrcp.pop %v534
    %v539 = vrcp.pop %v537
    %v540 = vmul.f32 %v529, %v538
    %v541 = vmul.f32 %v531, %v539
    %542 = vrot.lane.b32.xlu0 %v191, 48
    %v543 = vpop.permute.xlu0 %542
    %v546 = vsel %vm206, %v540, 0
    %548 = vmatpush.msra.mxu0 0.0
    %549 = vmatpush.msra.mxu0 0.0
    %550 = vmatpush.msra.mxu0 0.0
    %551 = vmatpush.msra.mxu0 0.0
    %552 = vmatpush.msra.mxu0 0.0
    %553 = vmatpush.msra.mxu0 0.0
    %554 = vmatpush.msra.mxu0 0.0
    %555 = vmatpush.msra.mxu0 0.0
    %556 = vmatpush.msra.mxu0 0.0
    %557 = vmatpush.msra.mxu0 0.0
    %558 = vmatpush.msra.mxu0 0.0
    %559 = vmatpush.msra.mxu0 0.0
    %560 = vmatpush.msra.mxu0 0.0
    %561 = vmatpush.msra.mxu0 0.0
    %562 = vmatpush.msra.mxu0 0.0
    %563 = vmatpush.msra.mxu0 %v543
    %564 = vmatmul.f32.gmra.mxu0 %v546
    %v565 = vpop.f32.mrf.mxu0
    %v566 = vadd.f32 0.0, %v565
    %567 = vdwg.mxu0
    %568 = vrot.lane.b32.xlu0 %v194, 48
    %v569 = vpop.permute.xlu0 %568
    %v572 = vsel %vm206, %v541, 0
    %574 = vmatpush.msra.mxu0 0.0
    %575 = vmatpush.msra.mxu0 0.0
    %576 = vmatpush.msra.mxu0 0.0
    %577 = vmatpush.msra.mxu0 0.0
    %578 = vmatpush.msra.mxu0 0.0
    %579 = vmatpush.msra.mxu0 0.0
    %580 = vmatpush.msra.mxu0 0.0
    %581 = vmatpush.msra.mxu0 0.0
    %582 = vmatpush.msra.mxu0 0.0
    %583 = vmatpush.msra.mxu0 0.0
    %584 = vmatpush.msra.mxu0 0.0
    %585 = vmatpush.msra.mxu0 0.0
    %586 = vmatpush.msra.mxu0 0.0
    %587 = vmatpush.msra.mxu0 0.0
    %588 = vmatpush.msra.mxu0 0.0
    %589 = vmatpush.msra.mxu0 %v569
    %590 = vmatmul.f32.gmra.mxu0 %v572
    %v591 = vpop.f32.mrf.mxu0
    %v592 = vadd.f32 0.0, %v591
    %593 = vdwg.mxu0
    %594 = vrot.lane.b32.xlu0 %v201, 104
    %v595 = vpop.permute.xlu0 %594
    %596 = vrot.lane.b32.xlu0 %v191, 72
    %v597 = vpop.permute.xlu0 %596
    %v598 = vsel %vm206, %v595, 0
    %v600 = vsel %vm206, %v597, 0
    %602 = vmatpush.xpose.msra.mxu0 0.0
    %603 = vmatpush.xpose.msra.mxu0 0.0
    %604 = vmatpush.xpose.msra.mxu0 0.0
    %605 = vmatpush.xpose.msra.mxu0 0.0
    %606 = vmatpush.xpose.msra.mxu0 0.0
    %607 = vmatpush.xpose.msra.mxu0 0.0
    %608 = vmatpush.xpose.msra.mxu0 0.0
    %609 = vmatpush.xpose.msra.mxu0 0.0
    %610 = vmatpush.xpose.msra.mxu0 0.0
    %611 = vmatpush.xpose.msra.mxu0 0.0
    %612 = vmatpush.xpose.msra.mxu0 0.0
    %613 = vmatpush.xpose.msra.mxu0 0.0
    %614 = vmatpush.xpose.msra.mxu0 0.0
    %615 = vmatpush.xpose.msra.mxu0 0.0
    %616 = vmatpush.xpose.msra.mxu0 0.0
    %617 = vmatpush.xpose.msra.mxu0 %v600
    %618 = vmatmul.f32.gmra.mxu0 %v598
    %v619 = vpop.f32.mrf.mxu0
    %v620 = vadd.f32 0.0, %v619
    %621 = vdwg.mxu0
    %622 = vrot.lane.b32.xlu0 %v202, 104
    %v623 = vpop.permute.xlu0 %622
    %624 = vrot.lane.b32.xlu0 %v194, 72
    %v625 = vpop.permute.xlu0 %624
    %v626 = vsel %vm206, %v623, 0
    %v628 = vsel %vm206, %v625, 0
    %630 = vmatpush.xpose.msra.mxu0 0.0
    %631 = vmatpush.xpose.msra.mxu0 0.0
    %632 = vmatpush.xpose.msra.mxu0 0.0
    %633 = vmatpush.xpose.msra.mxu0 0.0
    %634 = vmatpush.xpose.msra.mxu0 0.0
    %635 = vmatpush.xpose.msra.mxu0 0.0
    %636 = vmatpush.xpose.msra.mxu0 0.0
    %637 = vmatpush.xpose.msra.mxu0 0.0
    %638 = vmatpush.xpose.msra.mxu0 0.0
    %639 = vmatpush.xpose.msra.mxu0 0.0
    %640 = vmatpush.xpose.msra.mxu0 0.0
    %641 = vmatpush.xpose.msra.mxu0 0.0
    %642 = vmatpush.xpose.msra.mxu0 0.0
    %643 = vmatpush.xpose.msra.mxu0 0.0
    %644 = vmatpush.xpose.msra.mxu0 0.0
    %645 = vmatpush.xpose.msra.mxu0 %v628
    %646 = vmatmul.f32.gmra.mxu0 %v626
    %v647 = vpop.f32.mrf.mxu0
    %v648 = vadd.f32 0.0, %v647
    %649 = vdwg.mxu0
    %v650 = vsel %vm206, %v620, -inf
    %651 = vmax.xlane.f32.xlu0 %v650
    %v652 = vpop.xlane.xlu0 %651
    %v653 = vsel %vm206, %v648, -inf
    %654 = vmax.xlane.f32.xlu0 %v653
    %v655 = vpop.xlane.xlu0 %654
    %v656 = vsub.f32 %v620, %v652
    %v657 = vsub.f32 %v648, %v655
    %v658 = vmul.f32 %v656, 1.442695
    %v659 = vpow.pop %v658
    %v660 = vmul.f32 %v657, 1.442695
    %v661 = vpow.pop %v660
    %v662 = vsel %vm206, %v659, 0.0
    %663 = vadd.xlane.f32.xlu0 %v662
    %v664 = vpop.xlane.xlu0 %663
    %v665 = vsel %vm206, %v661, 0.0
    %666 = vadd.xlane.f32.xlu0 %v665
    %v667 = vpop.xlane.xlu0 %666
    %v668 = vrcp.pop %v664
    %v669 = vrcp.pop %v667
    %v670 = vmul.f32 %v659, %v668
    %v671 = vmul.f32 %v661, %v669
    %672 = vrot.lane.b32.xlu0 %v191, 40
    %v673 = vpop.permute.xlu0 %672
    %v676 = vsel %vm206, %v670, 0
    %678 = vmatpush.msra.mxu0 0.0
    %679 = vmatpush.msra.mxu0 0.0
    %680 = vmatpush.msra.mxu0 0.0
    %681 = vmatpush.msra.mxu0 0.0
    %682 = vmatpush.msra.mxu0 0.0
    %683 = vmatpush.msra.mxu0 0.0
    %684 = vmatpush.msra.mxu0 0.0
    %685 = vmatpush.msra.mxu0 0.0
    %686 = vmatpush.msra.mxu0 0.0
    %687 = vmatpush.msra.mxu0 0.0
    %688 = vmatpush.msra.mxu0 0.0
    %689 = vmatpush.msra.mxu0 0.0
    %690 = vmatpush.msra.mxu0 0.0
    %691 = vmatpush.msra.mxu0 0.0
    %692 = vmatpush.msra.mxu0 0.0
    %693 = vmatpush.msra.mxu0 %v673
    %694 = vmatmul.f32.gmra.mxu0 %v676
    %v695 = vpop.f32.mrf.mxu0
    %v696 = vadd.f32 0.0, %v695
    %697 = vdwg.mxu0
    %698 = vrot.lane.b32.xlu0 %v194, 40
    %v699 = vpop.permute.xlu0 %698
    %v702 = vsel %vm206, %v671, 0
    %704 = vmatpush.msra.mxu0 0.0
    %705 = vmatpush.msra.mxu0 0.0
    %706 = vmatpush.msra.mxu0 0.0
    %707 = vmatpush.msra.mxu0 0.0
    %708 = vmatpush.msra.mxu0 0.0
    %709 = vmatpush.msra.mxu0 0.0
    %710 = vmatpush.msra.mxu0 0.0
    %711 = vmatpush.msra.mxu0 0.0
    %712 = vmatpush.msra.mxu0 0.0
    %713 = vmatpush.msra.mxu0 0.0
    %714 = vmatpush.msra.mxu0 0.0
    %715 = vmatpush.msra.mxu0 0.0
    %716 = vmatpush.msra.mxu0 0.0
    %717 = vmatpush.msra.mxu0 0.0
    %718 = vmatpush.msra.mxu0 0.0
    %719 = vmatpush.msra.mxu0 %v699
    %720 = vmatmul.f32.gmra.mxu0 %v702
    %v721 = vpop.f32.mrf.mxu0
    %v722 = vadd.f32 0.0, %v721
    %723 = vdwg.mxu0
    %726 = vrot.lane.b32.xlu0 %v436, 8
    %v727 = vpop.permute.xlu0 %726
    %728 = vrot.lane.b32.xlu0 %v462, 8
    %v729 = vpop.permute.xlu0 %728
    %734 = vrot.lane.b32.xlu0 %v566, 16
    %v735 = vpop.permute.xlu0 %734
    %736 = vrot.lane.b32.xlu0 %v592, 16
    %v737 = vpop.permute.xlu0 %736
    %742 = vrot.lane.b32.xlu0 %v696, 24
    %v743 = vpop.permute.xlu0 %742
    %744 = vrot.lane.b32.xlu0 %v722, 24
    %v745 = vpop.permute.xlu0 %744
    %v748 = vsel %vm206, %v306, %v727
    %v749 = vsel %vm206, %v332, %v729
    %vm750 = vcmask 130048
    %v751 = vsel %vm750, %v748, %v735
    %v752 = vsel %vm750, %v749, %v737
    %vm753 = vcmask 195584
    %v754 = vsel %vm753, %v751, %v743
    %v755 = vsel %vm753, %v752, %v745
    %v757 = vperm.slane %v200, 0
    %v760 = vsel %vm166, %v754, 0
    %v763 = vsel %vm166, %v755, 0
    %765 = vmatpush.msra.mxu0 0.0
    %766 = vmatpush.msra.mxu0 0.0
    %767 = vmatpush.msra.mxu0 0.0
    %768 = vmatpush.msra.mxu0 0.0
    %769 = vmatpush.msra.mxu0 0.0
    %770 = vmatpush.msra.mxu0 0.0
    %771 = vmatpush.msra.mxu0 0.0
    %772 = vmatpush.msra.mxu0 0.0
    %773 = vmatpush.msra.mxu0 0.0
    %774 = vmatpush.msra.mxu0 0.0
    %775 = vmatpush.msra.mxu0 0.0
    %776 = vmatpush.msra.mxu0 0.0
    %777 = vmatpush.msra.mxu0 %v199
    %778 = vmatpush.msra.mxu0 %v198
    %779 = vmatpush.msra.mxu0 %v197
    %780 = vmatpush.msra.mxu0 %v196
    %781 = vmatmul.f32.gmra.mxu0 %v760
    %v782 = vpop.f32.mrf.mxu0
    %v783 = vadd.f32 %v757, %v782
    %784 = vmatmul.f32.gmra.mxu0 %v763
    %v785 = vpop.f32.mrf.mxu0
    %v786 = vadd.f32 %v757, %v785
    %787 = vdwg.mxu0
    %v788 = vadd.f32 %v156, %v783
    %v789 = vadd.f32 %v157, %v786
    %v790 = vld [vmem:[%s5] sm:$0x1]
    %v791 = vld [vmem:[%s6] sm:$0x1]
    %v792 = vsel %vm166, %v788, 0.0
    %793 = vadd.xlane.f32.xlu0 %v792
    %v794 = vpop.xlane.xlu0 %793
    %v795 = vsel %vm166, %v789, 0.0
    %796 = vadd.xlane.f32.xlu0 %v795
    %v797 = vpop.xlane.xlu0 %796
    %v798 = vrcp.pop 32.0
    %v799 = vmul.f32 32.0, %v798
    %v800 = vsub.f32 1.0, %v799
    %v801 = vmul.f32 %v798, %v800
    %v802 = vadd.f32 %v798, %v801
    %vm803 = vweird.f32 %v798
    %v804 = vsel %vm803, %v798, %v802
    %v805 = vmul.f32 %v794, %v804
    %v806 = vmul.f32 %v797, %v804
    %v807 = vmul.f32 %v788, %v788
    %v808 = vmul.f32 %v789, %v789
    %v809 = vsel %vm166, %v807, 0.0
    %810 = vadd.xlane.f32.xlu0 %v809
    %v811 = vpop.xlane.xlu0 %810
    %v812 = vsel %vm166, %v808, 0.0
    %813 = vadd.xlane.f32.xlu0 %v812
    %v814 = vpop.xlane.xlu0 %813
    %v815 = vmul.f32 %v811, %v804
    %v816 = vmul.f32 %v814, %v804
    %v817 = vmul.f32 %v805, %v805
    %v818 = vmul.f32 %v806, %v806
    %v819 = vsub.f32 %v815, %v817
    %v820 = vsub.f32 %v816, %v818
    %v821 = vsub.f32 %v788, %v805
    %v822 = vsub.f32 %v789, %v806
    %v823 = vadd.f32 %v819, 1e-05
    %v824 = vadd.f32 %v820, 1e-05
    %v825 = vrsqrt.pop %v823
    %v826 = vmul.f32 %v825, %v823
    %v827 = vmul.f32 %v826, %v825
    %v828 = vmul.f32 0.5, %v827
    %v829 = vsub.f32 1.5, %v828
    %v830 = vmul.f32 %v825, %v829
    %vm831 = vweird.f32 %v823
    %vm832 = vweird.f32 %v825
    %vm833 = vmor %vm831, %vm832
    %v834 = vsel %vm833, %v825, %v830
    %v835 = vrsqrt.pop %v824
    %v836 = vmul.f32 %v835, %v824
    %v837 = vmul.f32 %v836, %v835
    %v838 = vmul.f32 0.5, %v837
    %v839 = vsub.f32 1.5, %v838
    %v840 = vmul.f32 %v835, %v839
    %vm841 = vweird.f32 %v824
    %vm842 = vweird.f32 %v835
    %vm843 = vmor %vm841, %vm842
    %v844 = vsel %vm843, %v835, %v840
    %v845 = vmul.f32 %v821, %v834
    %v846 = vmul.f32 %v822, %v844
    %v848 = vperm.slane %v790, 0
    %v850 = vmul.f32 %v845, %v848
    %v851 = vmul.f32 %v846, %v848
    %v853 = vperm.slane %v791, 0
    %v855 = vadd.f32 %v850, %v853
    %v856 = vadd.f32 %v851, %v853
    %v857 = vld [vmem:[#allocation5] sm:$0xff]
    %v858 = vld [vmem:[#allocation5 + $0x8] sm:$0xff]
    %v859 = vld [vmem:[%s8] sm:$0xff]
    %v860 = vld [vmem:[%s8 + $0x8] sm:$0xff]
    %v861 = vld [vmem:[%s8 + $0x10] sm:$0xff]
    %v862 = vld [vmem:[%s8 + $0x18] sm:$0xff]
    %v863 = vld [vmem:[%s9] sm:$0x1]
    %v865 = vperm.slane %v863, 0
    %v868 = vsel %vm166, %v857, 0
    %v871 = vsel %vm166, %v858, 0
    %873 = vmatpush.msra.mxu0 0.0
    %874 = vmatpush.msra.mxu0 0.0
    %875 = vmatpush.msra.mxu0 0.0
    %876 = vmatpush.msra.mxu0 0.0
    %877 = vmatpush.msra.mxu0 0.0
    %878 = vmatpush.msra.mxu0 0.0
    %879 = vmatpush.msra.mxu0 0.0
    %880 = vmatpush.msra.mxu0 0.0
    %881 = vmatpush.msra.mxu0 0.0
    %882 = vmatpush.msra.mxu0 0.0
    %883 = vmatpush.msra.mxu0 0.0
    %884 = vmatpush.msra.mxu0 0.0
    %885 = vmatpush.msra.mxu0 %v862
    %886 = vmatpush.msra.mxu0 %v861
    %887 = vmatpush.msra.mxu0 %v860
    %888 = vmatpush.msra.mxu0 %v859
    %889 = vmatmul.f32.gmra.mxu0 %v868
    %v890 = vpop.f32.mrf.mxu0
    %v891 = vadd.f32 %v865, %v890
    %892 = vmatmul.f32.gmra.mxu0 %v871
    %v893 = vpop.f32.mrf.mxu0
    %v894 = vadd.f32 %v865, %v893
    %895 = vdwg.mxu0
    %v896 = vld [vmem:[#allocation7] sm:$0xff]
    %v897 = vld [vmem:[#allocation7 + $0x8] sm:$0xff]
    %v898 = vld [vmem:[#allocation7 + $0x10] sm:$0xff]
    %v899 = vld [vmem:[#allocation7 + $0x18] sm:$0xff]
    %v900 = vld [vmem:[%s11] sm:$0x1]
    %v902 = vperm.slane %v900, 0
    %v905 = vsel %vm166, %v855, 0
    %v908 = vsel %vm166, %v856, 0
    %910 = vmatpush.msra.mxu0 0.0
    %911 = vmatpush.msra.mxu0 0.0
    %912 = vmatpush.msra.mxu0 0.0
    %913 = vmatpush.msra.mxu0 0.0
    %914 = vmatpush.msra.mxu0 0.0
    %915 = vmatpush.msra.mxu0 0.0
    %916 = vmatpush.msra.mxu0 0.0
    %917 = vmatpush.msra.mxu0 0.0
    %918 = vmatpush.msra.mxu0 0.0
    %919 = vmatpush.msra.mxu0 0.0
    %920 = vmatpush.msra.mxu0 0.0
    %921 = vmatpush.msra.mxu0 0.0
    %922 = vmatpush.msra.mxu0 %v899
    %923 = vmatpush.msra.mxu0 %v898
    %924 = vmatpush.msra.mxu0 %v897
    %925 = vmatpush.msra.mxu0 %v896
    %926 = vmatmul.f32.gmra.mxu0 %v905
    %v927 = vpop.f32.mrf.mxu0
    %v928 = vadd.f32 %v902, %v927
    %929 = vmatmul.f32.gmra.mxu0 %v908
    %v930 = vpop.f32.mrf.mxu0
    %v931 = vadd.f32 %v902, %v930
    %932 = vdwg.mxu0
    %v933 = vld [vmem:[#allocation8] sm:$0xff]
    %v934 = vld [vmem:[#allocation8 + $0x8] sm:$0xff]
    %v935 = vld [vmem:[#allocation8 + $0x10] sm:$0xff]
    %v936 = vld [vmem:[#allocation8 + $0x18] sm:$0xff]
    %v937 = vld [vmem:[%s13] sm:$0x1]
    %v938 = vmul.f32 %v891, 0.35355338
    %v939 = vmul.f32 %v894, 0.35355338
    %v941 = vsel %vm206, %v938, 0
    %v944 = vsel %vm206, %v939, 0
    %v947 = vsel %vm206, %v928, 0
    %949 = vmatpush.xpose.msra.mxu0 0.0
    %950 = vmatpush.xpose.msra.mxu0 0.0
    %951 = vmatpush.xpose.msra.mxu0 0.0
    %952 = vmatpush.xpose.msra.mxu0 0.0
    %953 = vmatpush.xpose.msra.mxu0 0.0
    %954 = vmatpush.xpose.msra.mxu0 0.0
    %955 = vmatpush.xpose.msra.mxu0 0.0
    %956 = vmatpush.xpose.msra.mxu0 0.0
    %957 = vmatpush.xpose.msra.mxu0 0.0
    %958 = vmatpush.xpose.msra.mxu0 0.0
    %959 = vmatpush.xpose.msra.mxu0 0.0
    %960 = vmatpush.xpose.msra.mxu0 0.0
    %961 = vmatpush.xpose.msra.mxu0 0.0
    %962 = vmatpush.xpose.msra.mxu0 0.0
    %963 = vmatpush.xpose.msra.mxu0 0.0
    %964 = vmatpush.xpose.msra.mxu0 %v947
    %965 = vmatmul.f32.gmra.mxu0 %v941
    %v966 = vpop.f32.mrf.mxu0
    %v967 = vadd.f32 0.0, %v966
    %968 = vmatmul.f32.gmra.mxu0 %v944
    %v969 = vpop.f32.mrf.mxu0
    %v970 = vadd.f32 0.0, %v969
    %971 = vdwg.mxu0
    %v973 = vsel %vm206, %v931, 0
    %975 = vmatpush.xpose.msra.mxu0 0.0
    %976 = vmatpush.xpose.msra.mxu0 0.0
    %977 = vmatpush.xpose.msra.mxu0 0.0
    %978 = vmatpush.xpose.msra.mxu0 0.0
    %979 = vmatpush.xpose.msra.mxu0 0.0
    %980 = vmatpush.xpose.msra.mxu0 0.0
    %981 = vmatpush.xpose.msra.mxu0 0.0
    %982 = vmatpush.xpose.msra.mxu0 0.0
    %983 = vmatpush.xpose.msra.mxu0 0.0
    %984 = vmatpush.xpose.msra.mxu0 0.0
    %985 = vmatpush.xpose.msra.mxu0 0.0
    %986 = vmatpush.xpose.msra.mxu0 0.0
    %987 = vmatpush.xpose.msra.mxu0 0.0
    %988 = vmatpush.xpose.msra.mxu0 0.0
    %989 = vmatpush.xpose.msra.mxu0 0.0
    %990 = vmatpush.xpose.msra.mxu0 %v973
    %991 = vmatmul.f32.gmra.mxu0 %v941
    %v992 = vpop.f32.mrf.mxu0
    %v993 = vadd.f32 0.0, %v992
    %994 = vmatmul.f32.gmra.mxu0 %v944
    %v995 = vpop.f32.mrf.mxu0
    %v996 = vadd.f32 0.0, %v995
    %997 = vdwg.mxu0
    %v998 = vsel %vm206, %v967, -inf
    %999 = vmax.xlane.f32.xlu0 %v998
    %v1000 = vpop.xlane.xlu0 %999
    %v1001 = vsel %vm206, %v970, -inf
    %1002 = vmax.xlane.f32.xlu0 %v1001
    %v1003 = vpop.xlane.xlu0 %1002
    %v1004 = vsel %vm206, %v993, -inf
    %1005 = vmax.xlane.f32.xlu0 %v1004
    %v1006 = vpop.xlane.xlu0 %1005
    %v1007 = vsel %vm206, %v996, -inf
    %1008 = vmax.xlane.f32.xlu0 %v1007
    %v1009 = vpop.xlane.xlu0 %1008
    %v1010 = vsub.f32 %v967, %v1000
    %v1011 = vsub.f32 %v970, %v1003
    %v1012 = vsub.f32 %v993, %v1006
    %v1013 = vsub.f32 %v996, %v1009
    %v1014 = vmul.f32 %v1010, 1.442695
    %v1015 = vpow.pop %v1014
    %v1016 = vmul.f32 %v1011, 1.442695
    %v1017 = vpow.pop %v1016
    %v1018 = vmul.f32 %v1012, 1.442695
    %v1019 = vpow.pop %v1018
    %v1020 = vmul.f32 %v1013, 1.442695
    %v1021 = vpow.pop %v1020
    %v1022 = vsel %vm206, %v1015, 0.0
    %1023 = vadd.xlane.f32.xlu0 %v1022
    %v1024 = vpop.xlane.xlu0 %1023
    %v1025 = vsel %vm206, %v1017, 0.0
    %1026 = vadd.xlane.f32.xlu0 %v1025
    %v1027 = vpop.xlane.xlu0 %1026
    %v1028 = vsel %vm206, %v1019, 0.0
    %1029 = vadd.xlane.f32.xlu0 %v1028
    %v1030 = vpop.xlane.xlu0 %1029
    %v1031 = vsel %vm206, %v1021, 0.0
    %1032 = vadd.xlane.f32.xlu0 %v1031
    %v1033 = vpop.xlane.xlu0 %1032
    %v1034 = vrcp.pop %v1024
    %v1035 = vrcp.pop %v1027
    %v1036 = vrcp.pop %v1030
    %v1037 = vrcp.pop %v1033
    %v1038 = vmul.f32 %v1015, %v1034
    %v1039 = vmul.f32 %v1017, %v1035
    %v1040 = vmul.f32 %v1019, %v1036
    %v1041 = vmul.f32 %v1021, %v1037
    %1042 = vrot.lane.b32.xlu0 %v928, 96
    %v1043 = vpop.permute.xlu0 %1042
    %v1046 = vsel %vm206, %v1038, 0
    %v1049 = vsel %vm206, %v1039, 0
    %1051 = vmatpush.msra.mxu0 0.0
    %1052 = vmatpush.msra.mxu0 0.0
    %1053 = vmatpush.msra.mxu0 0.0
    %1054 = vmatpush.msra.mxu0 0.0
    %1055 = vmatpush.msra.mxu0 0.0
    %1056 = vmatpush.msra.mxu0 0.0
    %1057 = vmatpush.msra.mxu0 0.0
    %1058 = vmatpush.msra.mxu0 0.0
    %1059 = vmatpush.msra.mxu0 0.0
    %1060 = vmatpush.msra.mxu0 0.0
    %1061 = vmatpush.msra.mxu0 0.0
    %1062 = vmatpush.msra.mxu0 0.0
    %1063 = vmatpush.msra.mxu0 0.0
    %1064 = vmatpush.msra.mxu0 0.0
    %1065 = vmatpush.msra.mxu0 0.0
    %1066 = vmatpush.msra.mxu0 %v1043
    %1067 = vmatmul.f32.gmra.mxu0 %v1046
    %v1068 = vpop.f32.mrf.mxu0
    %v1069 = vadd.f32 0.0, %v1068
    %1070 = vmatmul.f32.gmra.mxu0 %v1049
    %v1071 = vpop.f32.mrf.mxu0
    %v1072 = vadd.f32 0.0, %v1071
    %1073 = vdwg.mxu0
    %1074 = vrot.lane.b32.xlu0 %v931, 96
    %v1075 = vpop.permute.xlu0 %1074
    %v1078 = vsel %vm206, %v1040, 0
    %v1081 = vsel %vm206, %v1041, 0
    %1083 = vmatpush.msra.mxu0 0.0
    %1084 = vmatpush.msra.mxu0 0.0
    %1085 = vmatpush.msra.mxu0 0.0
    %1086 = vmatpush.msra.mxu0 0.0
    %1087 = vmatpush.msra.mxu0 0.0
    %1088 = vmatpush.msra.mxu0 0.0
    %1089 = vmatpush.msra.mxu0 0.0
    %1090 = vmatpush.msra.mxu0 0.0
    %1091 = vmatpush.msra.mxu0 0.0
    %1092 = vmatpush.msra.mxu0 0.0
    %1093 = vmatpush.msra.mxu0 0.0
    %1094 = vmatpush.msra.mxu0 0.0
    %1095 = vmatpush.msra.mxu0 0.0
    %1096 = vmatpush.msra.mxu0 0.0
    %1097 = vmatpush.msra.mxu0 0.0
    %1098 = vmatpush.msra.mxu0 %v1075
    %1099 = vmatmul.f32.gmra.mxu0 %v1078
    %v1100 = vpop.f32.mrf.mxu0
    %v1101 = vadd.f32 0.0, %v1100
    %1102 = vmatmul.f32.gmra.mxu0 %v1081
    %v1103 = vpop.f32.mrf.mxu0
    %v1104 = vadd.f32 0.0, %v1103
    %1105 = vdwg.mxu0
    %1106 = vrot.lane.b32.xlu0 %v938, 120
    %v1107 = vpop.permute.xlu0 %1106
    %1108 = vrot.lane.b32.xlu0 %v939, 120
    %v1109 = vpop.permute.xlu0 %1108
    %1110 = vrot.lane.b32.xlu0 %v928, 120
    %v1111 = vpop.permute.xlu0 %1110
    %v1112 = vsel %vm206, %v1107, 0
    %v1114 = vsel %vm206, %v1109, 0
    %v1116 = vsel %vm206, %v1111, 0
    %1118 = vmatpush.xpose.msra.mxu0 0.0
    %1119 = vmatpush.xpose.msra.mxu0 0.0
    %1120 = vmatpush.xpose.msra.mxu0 0.0
    %1121 = vmatpush.xpose.msra.mxu0 0.0
    %1122 = vmatpush.xpose.msra.mxu0 0.0
    %1123 = vmatpush.xpose.msra.mxu0 0.0
    %1124 = vmatpush.xpose.msra.mxu0 0.0
    %1125 = vmatpush.xpose.msra.mxu0 0.0
    %1126 = vmatpush.xpose.msra.mxu0 0.0
    %1127 = vmatpush.xpose.msra.mxu0 0.0
    %1128 = vmatpush.xpose.msra.mxu0 0.0
    %1129 = vmatpush.xpose.msra.mxu0 0.0
    %1130 = vmatpush.xpose.msra.mxu0 0.0
    %1131 = vmatpush.xpose.msra.mxu0 0.0
    %1132 = vmatpush.xpose.msra.mxu0 0.0
    %1133 = vmatpush.xpose.msra.mxu0 %v1116
    %1134 = vmatmul.f32.gmra.mxu0 %v1112
    %v1135 = vpop.f32.mrf.mxu0
    %v1136 = vadd.f32 0.0, %v1135
    %1137 = vmatmul.f32.gmra.mxu0 %v1114
    %v1138 = vpop.f32.mrf.mxu0
    %v1139 = vadd.f32 0.0, %v1138
    %1140 = vdwg.mxu0
    %1141 = vrot.lane.b32.xlu0 %v931, 120
    %v1142 = vpop.permute.xlu0 %1141
    %v1143 = vsel %vm206, %v1142, 0
    %1145 = vmatpush.xpose.msra.mxu0 0.0
    %1146 = vmatpush.xpose.msra.mxu0 0.0
    %1147 = vmatpush.xpose.msra.mxu0 0.0
    %1148 = vmatpush.xpose.msra.mxu0 0.0
    %1149 = vmatpush.xpose.msra.mxu0 0.0
    %1150 = vmatpush.xpose.msra.mxu0 0.0
    %1151 = vmatpush.xpose.msra.mxu0 0.0
    %1152 = vmatpush.xpose.msra.mxu0 0.0
    %1153 = vmatpush.xpose.msra.mxu0 0.0
    %1154 = vmatpush.xpose.msra.mxu0 0.0
    %1155 = vmatpush.xpose.msra.mxu0 0.0
    %1156 = vmatpush.xpose.msra.mxu0 0.0
    %1157 = vmatpush.xpose.msra.mxu0 0.0
    %1158 = vmatpush.xpose.msra.mxu0 0.0
    %1159 = vmatpush.xpose.msra.mxu0 0.0
    %1160 = vmatpush.xpose.msra.mxu0 %v1143
    %1161 = vmatmul.f32.gmra.mxu0 %v1112
    %v1162 = vpop.f32.mrf.mxu0
    %v1163 = vadd.f32 0.0, %v1162
    %1164 = vmatmul.f32.gmra.mxu0 %v1114
    %v1165 = vpop.f32.mrf.mxu0
    %v1166 = vadd.f32 0.0, %v1165
    %1167 = vdwg.mxu0
    %v1168 = vsel %vm206, %v1136, -inf
    %1169 = vmax.xlane.f32.xlu0 %v1168
    %v1170 = vpop.xlane.xlu0 %1169
    %v1171 = vsel %vm206, %v1139, -inf
    %1172 = vmax.xlane.f32.xlu0 %v1171
    %v1173 = vpop.xlane.xlu0 %1172
    %v1174 = vsel %vm206, %v1163, -inf
    %1175 = vmax.xlane.f32.xlu0 %v1174
    %v1176 = vpop.xlane.xlu0 %1175
    %v1177 = vsel %vm206, %v1166, -inf
    %1178 = vmax.xlane.f32.xlu0 %v1177
    %v1179 = vpop.xlane.xlu0 %1178
    %v1180 = vsub.f32 %v1136, %v1170
    %v1181 = vsub.f32 %v1139, %v1173
    %v1182 = vsub.f32 %v1163, %v1176
    %v1183 = vsub.f32 %v1166, %v1179
    %v1184 = vmul.f32 %v1180, 1.442695
    %v1185 = vpow.pop %v1184
    %v1186 = vmul.f32 %v1181, 1.442695
    %v1187 = vpow.pop %v1186
    %v1188 = vmul.f32 %v1182, 1.442695
    %v1189 = vpow.pop %v1188
    %v1190 = vmul.f32 %v1183, 1.442695
    %v1191 = vpow.pop %v1190
    %v1192 = vsel %vm206, %v1185, 0.0
    %1193 = vadd.xlane.f32.xlu0 %v1192
    %v1194 = vpop.xlane.xlu0 %1193
    %v1195 = vsel %vm206, %v1187, 0.0
    %1196 = vadd.xlane.f32.xlu0 %v1195
    %v1197 = vpop.xlane.xlu0 %1196
    %v1198 = vsel %vm206, %v1189, 0.0
    %1199 = vadd.xlane.f32.xlu0 %v1198
    %v1200 = vpop.xlane.xlu0 %1199
    %v1201 = vsel %vm206, %v1191, 0.0
    %1202 = vadd.xlane.f32.xlu0 %v1201
    %v1203 = vpop.xlane.xlu0 %1202
    %v1204 = vrcp.pop %v1194
    %v1205 = vrcp.pop %v1197
    %v1206 = vrcp.pop %v1200
    %v1207 = vrcp.pop %v1203
    %v1208 = vmul.f32 %v1185, %v1204
    %v1209 = vmul.f32 %v1187, %v1205
    %v1210 = vmul.f32 %v1189, %v1206
    %v1211 = vmul.f32 %v1191, %v1207
    %1212 = vrot.lane.b32.xlu0 %v928, 88
    %v1213 = vpop.permute.xlu0 %1212
    %v1216 = vsel %vm206, %v1208, 0
    %v1219 = vsel %vm206, %v1209, 0
    %1221 = vmatpush.msra.mxu0 0.0
    %1222 = vmatpush.msra.mxu0 0.0
    %1223 = vmatpush.msra.mxu0 0.0
    %1224 = vmatpush.msra.mxu0 0.0
    %1225 = vmatpush.msra.mxu0 0.0
    %1226 = vmatpush.msra.mxu0 0.0
    %1227 = vmatpush.msra.mxu0 0.0
    %1228 = vmatpush.msra.mxu0 0.0
    %1229 = vmatpush.msra.mxu0 0.0
    %1230 = vmatpush.msra.mxu0 0.0
    %1231 = vmatpush.msra.mxu0 0.0
    %1232 = vmatpush.msra.mxu0 0.0
    %1233 = vmatpush.msra.mxu0 0.0
    %1234 = vmatpush.msra.mxu0 0.0
    %1235 = vmatpush.msra.mxu0 0.0
    %1236 = vmatpush.msra.mxu0 %v1213
    %1237 = vmatmul.f32.gmra.mxu0 %v1216
    %v1238 = vpop.f32.mrf.mxu0
    %v1239 = vadd.f32 0.0, %v1238
    %1240 = vmatmul.f32.gmra.mxu0 %v1219
    %v1241 = vpop.f32.mrf.mxu0
    %v1242 = vadd.f32 0.0, %v1241
    %1243 = vdwg.mxu0
    %1244 = vrot.lane.b32.xlu0 %v931, 88
    %v1245 = vpop.permute.xlu0 %1244
    %v1248 = vsel %vm206, %v1210, 0
    %v1251 = vsel %vm206, %v1211, 0
    %1253 = vmatpush.msra.mxu0 0.0
    %1254 = vmatpush.msra.mxu0 0.0
    %1255 = vmatpush.msra.mxu0 0.0
    %1256 = vmatpush.msra.mxu0 0.0
    %1257 = vmatpush.msra.mxu0 0.0
    %1258 = vmatpush.msra.mxu0 0.0
    %1259 = vmatpush.msra.mxu0 0.0
    %1260 = vmatpush.msra.mxu0 0.0
    %1261 = vmatpush.msra.mxu0 0.0
    %1262 = vmatpush.msra.mxu0 0.0
    %1263 = vmatpush.msra.mxu0 0.0
    %1264 = vmatpush.msra.mxu0 0.0
    %1265 = vmatpush.msra.mxu0 0.0
    %1266 = vmatpush.msra.mxu0 0.0
    %1267 = vmatpush.msra.mxu0 0.0
    %1268 = vmatpush.msra.mxu0 %v1245
    %1269 = vmatmul.f32.gmra.mxu0 %v1248
    %v1270 = vpop.f32.mrf.mxu0
    %v1271 = vadd.f32 0.0, %v1270
    %1272 = vmatmul.f32.gmra.mxu0 %v1251
    %v1273 = vpop.f32.mrf.mxu0
    %v1274 = vadd.f32 0.0, %v1273
    %1275 = vdwg.mxu0
    %1276 = vrot.lane.b32.xlu0 %v938, 112
    %v1277 = vpop.permute.xlu0 %1276
    %1278 = vrot.lane.b32.xlu0 %v939, 112
    %v1279 = vpop.permute.xlu0 %1278
    %1280 = vrot.lane.b32.xlu0 %v928, 112
    %v1281 = vpop.permute.xlu0 %1280
    %v1282 = vsel %vm206, %v1277, 0
    %v1284 = vsel %vm206, %v1279, 0
    %v1286 = vsel %vm206, %v1281, 0
    %1288 = vmatpush.xpose.msra.mxu0 0.0
    %1289 = vmatpush.xpose.msra.mxu0 0.0
    %1290 = vmatpush.xpose.msra.mxu0 0.0
    %1291 = vmatpush.xpose.msra.mxu0 0.0
    %1292 = vmatpush.xpose.msra.mxu0 0.0
    %1293 = vmatpush.xpose.msra.mxu0 0.0
    %1294 = vmatpush.xpose.msra.mxu0 0.0
    %1295 = vmatpush.xpose.msra.mxu0 0.0
    %1296 = vmatpush.xpose.msra.mxu0 0.0
    %1297 = vmatpush.xpose.msra.mxu0 0.0
    %1298 = vmatpush.xpose.msra.mxu0 0.0
    %1299 = vmatpush.xpose.msra.mxu0 0.0
    %1300 = vmatpush.xpose.msra.mxu0 0.0
    %1301 = vmatpush.xpose.msra.mxu0 0.0
    %1302 = vmatpush.xpose.msra.mxu0 0.0
    %1303 = vmatpush.xpose.msra.mxu0 %v1286
    %1304 = vmatmul.f32.gmra.mxu0 %v1282
    %v1305 = vpop.f32.mrf.mxu0
    %v1306 = vadd.f32 0.0, %v1305
    %1307 = vmatmul.f32.gmra.mxu0 %v1284
    %v1308 = vpop.f32.mrf.mxu0
    %v1309 = vadd.f32 0.0, %v1308
    %1310 = vdwg.mxu0
    %1311 = vrot.lane.b32.xlu0 %v931, 112
    %v1312 = vpop.permute.xlu0 %1311
    %v1313 = vsel %vm206, %v1312, 0
    %1315 = vmatpush.xpose.msra.mxu0 0.0
    %1316 = vmatpush.xpose.msra.mxu0 0.0
    %1317 = vmatpush.xpose.msra.mxu0 0.0
    %1318 = vmatpush.xpose.msra.mxu0 0.0
    %1319 = vmatpush.xpose.msra.mxu0 0.0
    %1320 = vmatpush.xpose.msra.mxu0 0.0
    %1321 = vmatpush.xpose.msra.mxu0 0.0
    %1322 = vmatpush.xpose.msra.mxu0 0.0
    %1323 = vmatpush.xpose.msra.mxu0 0.0
    %1324 = vmatpush.xpose.msra.mxu0 0.0
    %1325 = vmatpush.xpose.msra.mxu0 0.0
    %1326 = vmatpush.xpose.msra.mxu0 0.0
    %1327 = vmatpush.xpose.msra.mxu0 0.0
    %1328 = vmatpush.xpose.msra.mxu0 0.0
    %1329 = vmatpush.xpose.msra.mxu0 0.0
    %1330 = vmatpush.xpose.msra.mxu0 %v1313
    %1331 = vmatmul.f32.gmra.mxu0 %v1282
    %v1332 = vpop.f32.mrf.mxu0
    %v1333 = vadd.f32 0.0, %v1332
    %1334 = vmatmul.f32.gmra.mxu0 %v1284
    %v1335 = vpop.f32.mrf.mxu0
    %v1336 = vadd.f32 0.0, %v1335
    %1337 = vdwg.mxu0
    %v1338 = vsel %vm206, %v1306, -inf
    %1339 = vmax.xlane.f32.xlu0 %v1338
    %v1340 = vpop.xlane.xlu0 %1339
    %v1341 = vsel %vm206, %v1309, -inf
    %1342 = vmax.xlane.f32.xlu0 %v1341
    %v1343 = vpop.xlane.xlu0 %1342
    %v1344 = vsel %vm206, %v1333, -inf
    %1345 = vmax.xlane.f32.xlu0 %v1344
    %v1346 = vpop.xlane.xlu0 %1345
    %v1347 = vsel %vm206, %v1336, -inf
    %1348 = vmax.xlane.f32.xlu0 %v1347
    %v1349 = vpop.xlane.xlu0 %1348
    %v1350 = vsub.f32 %v1306, %v1340
    %v1351 = vsub.f32 %v1309, %v1343
    %v1352 = vsub.f32 %v1333, %v1346
    %v1353 = vsub.f32 %v1336, %v1349
    %v1354 = vmul.f32 %v1350, 1.442695
    %v1355 = vpow.pop %v1354
    %v1356 = vmul.f32 %v1351, 1.442695
    %v1357 = vpow.pop %v1356
    %v1358 = vmul.f32 %v1352, 1.442695
    %v1359 = vpow.pop %v1358
    %v1360 = vmul.f32 %v1353, 1.442695
    %v1361 = vpow.pop %v1360
    %v1362 = vsel %vm206, %v1355, 0.0
    %1363 = vadd.xlane.f32.xlu0 %v1362
    %v1364 = vpop.xlane.xlu0 %1363
    %v1365 = vsel %vm206, %v1357, 0.0
    %1366 = vadd.xlane.f32.xlu0 %v1365
    %v1367 = vpop.xlane.xlu0 %1366
    %v1368 = vsel %vm206, %v1359, 0.0
    %1369 = vadd.xlane.f32.xlu0 %v1368
    %v1370 = vpop.xlane.xlu0 %1369
    %v1371 = vsel %vm206, %v1361, 0.0
    %1372 = vadd.xlane.f32.xlu0 %v1371
    %v1373 = vpop.xlane.xlu0 %1372
    %v1374 = vrcp.pop %v1364
    %v1375 = vrcp.pop %v1367
    %v1376 = vrcp.pop %v1370
    %v1377 = vrcp.pop %v1373
    %v1378 = vmul.f32 %v1355, %v1374
    %v1379 = vmul.f32 %v1357, %v1375
    %v1380 = vmul.f32 %v1359, %v1376
    %v1381 = vmul.f32 %v1361, %v1377
    %1382 = vrot.lane.b32.xlu0 %v928, 80
    %v1383 = vpop.permute.xlu0 %1382
    %v1386 = vsel %vm206, %v1378, 0
    %v1389 = vsel %vm206, %v1379, 0
    %1391 = vmatpush.msra.mxu0 0.0
    %1392 = vmatpush.msra.mxu0 0.0
    %1393 = vmatpush.msra.mxu0 0.0
    %1394 = vmatpush.msra.mxu0 0.0
    %1395 = vmatpush.msra.mxu0 0.0
    %1396 = vmatpush.msra.mxu0 0.0
    %1397 = vmatpush.msra.mxu0 0.0
    %1398 = vmatpush.msra.mxu0 0.0
    %1399 = vmatpush.msra.mxu0 0.0
    %1400 = vmatpush.msra.mxu0 0.0
    %1401 = vmatpush.msra.mxu0 0.0
    %1402 = vmatpush.msra.mxu0 0.0
    %1403 = vmatpush.msra.mxu0 0.0
    %1404 = vmatpush.msra.mxu0 0.0
    %1405 = vmatpush.msra.mxu0 0.0
    %1406 = vmatpush.msra.mxu0 %v1383
    %1407 = vmatmul.f32.gmra.mxu0 %v1386
    %v1408 = vpop.f32.mrf.mxu0
    %v1409 = vadd.f32 0.0, %v1408
    %1410 = vmatmul.f32.gmra.mxu0 %v1389
    %v1411 = vpop.f32.mrf.mxu0
    %v1412 = vadd.f32 0.0, %v1411
    %1413 = vdwg.mxu0
    %1414 = vrot.lane.b32.xlu0 %v931, 80
    %v1415 = vpop.permute.xlu0 %1414
    %v1418 = vsel %vm206, %v1380, 0
    %v1421 = vsel %vm206, %v1381, 0
    %1423 = vmatpush.msra.mxu0 0.0
    %1424 = vmatpush.msra.mxu0 0.0
    %1425 = vmatpush.msra.mxu0 0.0
    %1426 = vmatpush.msra.mxu0 0.0
    %1427 = vmatpush.msra.mxu0 0.0
    %1428 = vmatpush.msra.mxu0 0.0
    %1429 = vmatpush.msra.mxu0 0.0
    %1430 = vmatpush.msra.mxu0 0.0
    %1431 = vmatpush.msra.mxu0 0.0
    %1432 = vmatpush.msra.mxu0 0.0
    %1433 = vmatpush.msra.mxu0 0.0
    %1434 = vmatpush.msra.mxu0 0.0
    %1435 = vmatpush.msra.mxu0 0.0
    %1436 = vmatpush.msra.mxu0 0.0
    %1437 = vmatpush.msra.mxu0 0.0
    %1438 = vmatpush.msra.mxu0 %v1415
    %1439 = vmatmul.f32.gmra.mxu0 %v1418
    %v1440 = vpop.f32.mrf.mxu0
    %v1441 = vadd.f32 0.0, %v1440
    %1442 = vmatmul.f32.gmra.mxu0 %v1421
    %v1443 = vpop.f32.mrf.mxu0
    %v1444 = vadd.f32 0.0, %v1443
    %1445 = vdwg.mxu0
    %1446 = vrot.lane.b32.xlu0 %v938, 104
    %v1447 = vpop.permute.xlu0 %1446
    %1448 = vrot.lane.b32.xlu0 %v939, 104
    %v1449 = vpop.permute.xlu0 %1448
    %1450 = vrot.lane.b32.xlu0 %v928, 104
    %v1451 = vpop.permute.xlu0 %1450
    %v1452 = vsel %vm206, %v1447, 0
    %v1454 = vsel %vm206, %v1449, 0
    %v1456 = vsel %vm206, %v1451, 0
    %1458 = vmatpush.xpose.msra.mxu0 0.0
    %1459 = vmatpush.xpose.msra.mxu0 0.0
    %1460 = vmatpush.xpose.msra.mxu0 0.0
    %1461 = vmatpush.xpose.msra.mxu0 0.0
    %1462 = vmatpush.xpose.msra.mxu0 0.0
    %1463 = vmatpush.xpose.msra.mxu0 0.0
    %1464 = vmatpush.xpose.msra.mxu0 0.0
    %1465 = vmatpush.xpose.msra.mxu0 0.0
    %1466 = vmatpush.xpose.msra.mxu0 0.0
    %1467 = vmatpush.xpose.msra.mxu0 0.0
    %1468 = vmatpush.xpose.msra.mxu0 0.0
    %1469 = vmatpush.xpose.msra.mxu0 0.0
    %1470 = vmatpush.xpose.msra.mxu0 0.0
    %1471 = vmatpush.xpose.msra.mxu0 0.0
    %1472 = vmatpush.xpose.msra.mxu0 0.0
    %1473 = vmatpush.xpose.msra.mxu0 %v1456
    %1474 = vmatmul.f32.gmra.mxu0 %v1452
    %v1475 = vpop.f32.mrf.mxu0
    %v1476 = vadd.f32 0.0, %v1475
    %1477 = vmatmul.f32.gmra.mxu0 %v1454
    %v1478 = vpop.f32.mrf.mxu0
    %v1479 = vadd.f32 0.0, %v1478
    %1480 = vdwg.mxu0
    %1481 = vrot.lane.b32.xlu0 %v931, 104
    %v1482 = vpop.permute.xlu0 %1481
    %v1483 = vsel %vm206, %v1482, 0
    %1485 = vmatpush.xpose.msra.mxu0 0.0
    %1486 = vmatpush.xpose.msra.mxu0 0.0
    %1487 = vmatpush.xpose.msra.mxu0 0.0
    %1488 = vmatpush.xpose.msra.mxu0 0.0
    %1489 = vmatpush.xpose.msra.mxu0 0.0
    %1490 = vmatpush.xpose.msra.mxu0 0.0
    %1491 = vmatpush.xpose.msra.mxu0 0.0
    %1492 = vmatpush.xpose.msra.mxu0 0.0
    %1493 = vmatpush.xpose.msra.mxu0 0.0
    %1494 = vmatpush.xpose.msra.mxu0 0.0
    %1495 = vmatpush.xpose.msra.mxu0 0.0
    %1496 = vmatpush.xpose.msra.mxu0 0.0
    %1497 = vmatpush.xpose.msra.mxu0 0.0
    %1498 = vmatpush.xpose.msra.mxu0 0.0
    %1499 = vmatpush.xpose.msra.mxu0 0.0
    %1500 = vmatpush.xpose.msra.mxu0 %v1483
    %1501 = vmatmul.f32.gmra.mxu0 %v1452
    %v1502 = vpop.f32.mrf.mxu0
    %v1503 = vadd.f32 0.0, %v1502
    %1504 = vmatmul.f32.gmra.mxu0 %v1454
    %v1505 = vpop.f32.mrf.mxu0
    %v1506 = vadd.f32 0.0, %v1505
    %1507 = vdwg.mxu0
    %v1508 = vsel %vm206, %v1476, -inf
    %1509 = vmax.xlane.f32.xlu0 %v1508
    %v1510 = vpop.xlane.xlu0 %1509
    %v1511 = vsel %vm206, %v1479, -inf
    %1512 = vmax.xlane.f32.xlu0 %v1511
    %v1513 = vpop.xlane.xlu0 %1512
    %v1514 = vsel %vm206, %v1503, -inf
    %1515 = vmax.xlane.f32.xlu0 %v1514
    %v1516 = vpop.xlane.xlu0 %1515
    %v1517 = vsel %vm206, %v1506, -inf
    %1518 = vmax.xlane.f32.xlu0 %v1517
    %v1519 = vpop.xlane.xlu0 %1518
    %v1520 = vsub.f32 %v1476, %v1510
    %v1521 = vsub.f32 %v1479, %v1513
    %v1522 = vsub.f32 %v1503, %v1516
    %v1523 = vsub.f32 %v1506, %v1519
    %v1524 = vmul.f32 %v1520, 1.442695
    %v1525 = vpow.pop %v1524
    %v1526 = vmul.f32 %v1521, 1.442695
    %v1527 = vpow.pop %v1526
    %v1528 = vmul.f32 %v1522, 1.442695
    %v1529 = vpow.pop %v1528
    %v1530 = vmul.f32 %v1523, 1.442695
    %v1531 = vpow.pop %v1530
    %v1532 = vsel %vm206, %v1525, 0.0
    %1533 = vadd.xlane.f32.xlu0 %v1532
    %v1534 = vpop.xlane.xlu0 %1533
    %v1535 = vsel %vm206, %v1527, 0.0
    %1536 = vadd.xlane.f32.xlu0 %v1535
    %v1537 = vpop.xlane.xlu0 %1536
    %v1538 = vsel %vm206, %v1529, 0.0
    %1539 = vadd.xlane.f32.xlu0 %v1538
    %v1540 = vpop.xlane.xlu0 %1539
    %v1541 = vsel %vm206, %v1531, 0.0
    %1542 = vadd.xlane.f32.xlu0 %v1541
    %v1543 = vpop.xlane.xlu0 %1542
    %v1544 = vrcp.pop %v1534
    %v1545 = vrcp.pop %v1537
    %v1546 = vrcp.pop %v1540
    %v1547 = vrcp.pop %v1543
    %v1548 = vmul.f32 %v1525, %v1544
    %v1549 = vmul.f32 %v1527, %v1545
    %v1550 = vmul.f32 %v1529, %v1546
    %v1551 = vmul.f32 %v1531, %v1547
    %1552 = vrot.lane.b32.xlu0 %v928, 72
    %v1553 = vpop.permute.xlu0 %1552
    %v1556 = vsel %vm206, %v1548, 0
    %v1559 = vsel %vm206, %v1549, 0
    %1561 = vmatpush.msra.mxu0 0.0
    %1562 = vmatpush.msra.mxu0 0.0
    %1563 = vmatpush.msra.mxu0 0.0
    %1564 = vmatpush.msra.mxu0 0.0
    %1565 = vmatpush.msra.mxu0 0.0
    %1566 = vmatpush.msra.mxu0 0.0
    %1567 = vmatpush.msra.mxu0 0.0
    %1568 = vmatpush.msra.mxu0 0.0
    %1569 = vmatpush.msra.mxu0 0.0
    %1570 = vmatpush.msra.mxu0 0.0
    %1571 = vmatpush.msra.mxu0 0.0
    %1572 = vmatpush.msra.mxu0 0.0
    %1573 = vmatpush.msra.mxu0 0.0
    %1574 = vmatpush.msra.mxu0 0.0
    %1575 = vmatpush.msra.mxu0 0.0
    %1576 = vmatpush.msra.mxu0 %v1553
    %1577 = vmatmul.f32.gmra.mxu0 %v1556
    %v1578 = vpop.f32.mrf.mxu0
    %v1579 = vadd.f32 0.0, %v1578
    %1580 = vmatmul.f32.gmra.mxu0 %v1559
    %v1581 = vpop.f32.mrf.mxu0
    %v1582 = vadd.f32 0.0, %v1581
    %1583 = vdwg.mxu0
    %1584 = vrot.lane.b32.xlu0 %v931, 72
    %v1585 = vpop.permute.xlu0 %1584
    %v1588 = vsel %vm206, %v1550, 0
    %v1591 = vsel %vm206, %v1551, 0
    %1593 = vmatpush.msra.mxu0 0.0
    %1594 = vmatpush.msra.mxu0 0.0
    %1595 = vmatpush.msra.mxu0 0.0
    %1596 = vmatpush.msra.mxu0 0.0
    %1597 = vmatpush.msra.mxu0 0.0
    %1598 = vmatpush.msra.mxu0 0.0
    %1599 = vmatpush.msra.mxu0 0.0
    %1600 = vmatpush.msra.mxu0 0.0
    %1601 = vmatpush.msra.mxu0 0.0
    %1602 = vmatpush.msra.mxu0 0.0
    %1603 = vmatpush.msra.mxu0 0.0
    %1604 = vmatpush.msra.mxu0 0.0
    %1605 = vmatpush.msra.mxu0 0.0
    %1606 = vmatpush.msra.mxu0 0.0
    %1607 = vmatpush.msra.mxu0 0.0
    %1608 = vmatpush.msra.mxu0 %v1585
    %1609 = vmatmul.f32.gmra.mxu0 %v1588
    %v1610 = vpop.f32.mrf.mxu0
    %v1611 = vadd.f32 0.0, %v1610
    %1612 = vmatmul.f32.gmra.mxu0 %v1591
    %v1613 = vpop.f32.mrf.mxu0
    %v1614 = vadd.f32 0.0, %v1613
    %1615 = vdwg.mxu0
    %1620 = vrot.lane.b32.xlu0 %v1239, 8
    %v1621 = vpop.permute.xlu0 %1620
    %1622 = vrot.lane.b32.xlu0 %v1242, 8
    %v1623 = vpop.permute.xlu0 %1622
    %1624 = vrot.lane.b32.xlu0 %v1271, 8
    %v1625 = vpop.permute.xlu0 %1624
    %1626 = vrot.lane.b32.xlu0 %v1274, 8
    %v1627 = vpop.permute.xlu0 %1626
    %1636 = vrot.lane.b32.xlu0 %v1409, 16
    %v1637 = vpop.permute.xlu0 %1636
    %1638 = vrot.lane.b32.xlu0 %v1412, 16
    %v1639 = vpop.permute.xlu0 %1638
    %1640 = vrot.lane.b32.xlu0 %v1441, 16
    %v1641 = vpop.permute.xlu0 %1640
    %1642 = vrot.lane.b32.xlu0 %v1444, 16
    %v1643 = vpop.permute.xlu0 %1642
    %1652 = vrot.lane.b32.xlu0 %v1579, 24
    %v1653 = vpop.permute.xlu0 %1652
    %1654 = vrot.lane.b32.xlu0 %v1582, 24
    %v1655 = vpop.permute.xlu0 %1654
    %1656 = vrot.lane.b32.xlu0 %v1611, 24
    %v1657 = vpop.permute.xlu0 %1656
    %1658 = vrot.lane.b32.xlu0 %v1614, 24
    %v1659 = vpop.permute.xlu0 %1658
    %v1664 = vsel %vm206, %v1069, %v1621
    %v1665 = vsel %vm206, %v1072, %v1623
    %v1666 = vsel %vm206, %v1101, %v1625
    %v1667 = vsel %vm206, %v1104, %v1627
    %v1668 = vsel %vm750, %v1664, %v1637
    %v1669 = vsel %vm750, %v1665, %v1639
    %v1670 = vsel %vm750, %v1666, %v1641
    %v1671 = vsel %vm750, %v1667, %v1643
    %v1672 = vsel %vm753, %v1668, %v1653
    %v1673 = vsel %vm753, %v1669, %v1655
    %v1674 = vsel %vm753, %v1670, %v1657
    %v1675 = vsel %vm753, %v1671, %v1659
    %v1677 = vperm.slane %v937, 0
    %v1680 = vsel %vm166, %v1672, 0
    %v1683 = vsel %vm166, %v1673, 0
    %v1686 = vsel %vm166, %v1674, 0
    %v1689 = vsel %vm166, %v1675, 0
    %1691 = vmatpush.msra.mxu0 0.0
    %1692 = vmatpush.msra.mxu0 0.0
    %1693 = vmatpush.msra.mxu0 0.0
    %1694 = vmatpush.msra.mxu0 0.0
    %1695 = vmatpush.msra.mxu0 0.0
    %1696 = vmatpush.msra.mxu0 0.0
    %1697 = vmatpush.msra.mxu0 0.0
    %1698 = vmatpush.msra.mxu0 0.0
    %1699 = vmatpush.msra.mxu0 0.0
    %1700 = vmatpush.msra.mxu0 0.0
    %1701 = vmatpush.msra.mxu0 0.0
    %1702 = vmatpush.msra.mxu0 0.0
    %1703 = vmatpush.msra.mxu0 %v936
    %1704 = vmatpush.msra.mxu0 %v935
    %1705 = vmatpush.msra.mxu0 %v934
    %1706 = vmatpush.msra.mxu0 %v933
    %1707 = vmatmul.f32.gmra.mxu0 %v1680
    %v1708 = vpop.f32.mrf.mxu0
    %v1709 = vadd.f32 %v1677, %v1708
    %1710 = vmatmul.f32.gmra.mxu0 %v1683
    %v1711 = vpop.f32.mrf.mxu0
    %v1712 = vadd.f32 %v1677, %v1711
    %1713 = vmatmul.f32.gmra.mxu0 %v1686
    %v1714 = vpop.f32.mrf.mxu0
    %v1715 = vadd.f32 %v1677, %v1714
    %1716 = vmatmul.f32.gmra.mxu0 %v1689
    %v1717 = vpop.f32.mrf.mxu0
    %v1718 = vadd.f32 %v1677, %v1717
    %1719 = vdwg.mxu0
    %v1720 = vld [vmem:[%s14] sm:$0x1]
    %v1721 = vld [vmem:[%s15] sm:$0x1]
    %v1722 = vsel %vm166, %v1709, 0.0
    %1723 = vadd.xlane.f32.xlu0 %v1722
    %v1724 = vpop.xlane.xlu0 %1723
    %v1725 = vsel %vm166, %v1712, 0.0
    %1726 = vadd.xlane.f32.xlu0 %v1725
    %v1727 = vpop.xlane.xlu0 %1726
    %v1728 = vsel %vm166, %v1715, 0.0
    %1729 = vadd.xlane.f32.xlu0 %v1728
    %v1730 = vpop.xlane.xlu0 %1729
    %v1731 = vsel %vm166, %v1718, 0.0
    %1732 = vadd.xlane.f32.xlu0 %v1731
    %v1733 = vpop.xlane.xlu0 %1732
    %v1734 = vmul.f32 %v1724, %v804
    %v1735 = vmul.f32 %v1727, %v804
    %v1736 = vmul.f32 %v1730, %v804
    %v1737 = vmul.f32 %v1733, %v804
    %v1738 = vmul.f32 %v1709, %v1709
    %v1739 = vmul.f32 %v1712, %v1712
    %v1740 = vmul.f32 %v1715, %v1715
    %v1741 = vmul.f32 %v1718, %v1718
    %v1742 = vsel %vm166, %v1738, 0.0
    %1743 = vadd.xlane.f32.xlu0 %v1742
    %v1744 = vpop.xlane.xlu0 %1743
    %v1745 = vsel %vm166, %v1739, 0.0
    %1746 = vadd.xlane.f32.xlu0 %v1745
    %v1747 = vpop.xlane.xlu0 %1746
    %v1748 = vsel %vm166, %v1740, 0.0
    %1749 = vadd.xlane.f32.xlu0 %v1748
    %v1750 = vpop.xlane.xlu0 %1749
    %v1751 = vsel %vm166, %v1741, 0.0
    %1752 = vadd.xlane.f32.xlu0 %v1751
    %v1753 = vpop.xlane.xlu0 %1752
    %v1754 = vmul.f32 %v1744, %v804
    %v1755 = vmul.f32 %v1747, %v804
    %v1756 = vmul.f32 %v1750, %v804
    %v1757 = vmul.f32 %v1753, %v804
    %v1758 = vmul.f32 %v1734, %v1734
    %v1759 = vmul.f32 %v1735, %v1735
    %v1760 = vmul.f32 %v1736, %v1736
    %v1761 = vmul.f32 %v1737, %v1737
    %v1762 = vsub.f32 %v1754, %v1758
    %v1763 = vsub.f32 %v1755, %v1759
    %v1764 = vsub.f32 %v1756, %v1760
    %v1765 = vsub.f32 %v1757, %v1761
    %v1766 = vsub.f32 %v1709, %v1734
    %v1767 = vsub.f32 %v1712, %v1735
    %v1768 = vsub.f32 %v1715, %v1736
    %v1769 = vsub.f32 %v1718, %v1737
    %v1770 = vadd.f32 %v1762, 1e-05
    %v1771 = vadd.f32 %v1763, 1e-05
    %v1772 = vadd.f32 %v1764, 1e-05
    %v1773 = vadd.f32 %v1765, 1e-05
    %v1774 = vrsqrt.pop %v1770
    %v1775 = vmul.f32 %v1774, %v1770
    %v1776 = vmul.f32 %v1775, %v1774
    %v1777 = vmul.f32 0.5, %v1776
    %v1778 = vsub.f32 1.5, %v1777
    %v1779 = vmul.f32 %v1774, %v1778
    %vm1780 = vweird.f32 %v1770
    %vm1781 = vweird.f32 %v1774
    %vm1782 = vmor %vm1780, %vm1781
    %v1783 = vsel %vm1782, %v1774, %v1779
    %v1784 = vrsqrt.pop %v1771
    %v1785 = vmul.f32 %v1784, %v1771
    %v1786 = vmul.f32 %v1785, %v1784
    %v1787 = vmul.f32 0.5, %v1786
    %v1788 = vsub.f32 1.5, %v1787
    %v1789 = vmul.f32 %v1784, %v1788
    %vm1790 = vweird.f32 %v1771
    %vm1791 = vweird.f32 %v1784
    %vm1792 = vmor %vm1790, %vm1791
    %v1793 = vsel %vm1792, %v1784, %v1789
    %v1794 = vrsqrt.pop %v1772
    %v1795 = vmul.f32 %v1794, %v1772
    %v1796 = vmul.f32 %v1795, %v1794
    %v1797 = vmul.f32 0.5, %v1796
    %v1798 = vsub.f32 1.5, %v1797
    %v1799 = vmul.f32 %v1794, %v1798
    %vm1800 = vweird.f32 %v1772
    %vm1801 = vweird.f32 %v1794
    %vm1802 = vmor %vm1800, %vm1801
    %v1803 = vsel %vm1802, %v1794, %v1799
    %v1804 = vrsqrt.pop %v1773
    %v1805 = vmul.f32 %v1804, %v1773
    %v1806 = vmul.f32 %v1805, %v1804
    %v1807 = vmul.f32 0.5, %v1806
    %v1808 = vsub.f32 1.5, %v1807
    %v1809 = vmul.f32 %v1804, %v1808
    %vm1810 = vweird.f32 %v1773
    %vm1811 = vweird.f32 %v1804
    %vm1812 = vmor %vm1810, %vm1811
    %v1813 = vsel %vm1812, %v1804, %v1809
    %v1814 = vmul.f32 %v1766, %v1783
    %v1815 = vmul.f32 %v1767, %v1793
    %v1816 = vmul.f32 %v1768, %v1803
    %v1817 = vmul.f32 %v1769, %v1813
    %v1819 = vperm.slane %v1720, 0
    %v1821 = vmul.f32 %v1814, %v1819
    %v1822 = vmul.f32 %v1815, %v1819
    %v1823 = vmul.f32 %v1816, %v1819
    %v1824 = vmul.f32 %v1817, %v1819
    %v1826 = vperm.slane %v1721, 0
    %v1828 = vadd.f32 %v1821, %v1826
    %v1829 = vadd.f32 %v1822, %v1826
    %v1830 = vadd.f32 %v1823, %v1826
    %v1831 = vadd.f32 %v1824, %v1826
    %v1832 = vsel %vm166, %v1828, 0.0
    %v1833 = vsel %vm166, %v1829, 0.0
    %v1834 = vadd.f32 %v1832, %v1833
    %v1835 = vrot.slane %v1834, 4
    %v1836 = vadd.f32 %v1834, %v1835
    %v1837 = vrot.slane %v1836, 2
    %v1838 = vadd.f32 %v1836, %v1837
    %v1839 = vrot.slane %v1838, 1
    %v1840 = vadd.f32 %v1838, %v1839
    %v1841 = vsel %vm166, %v1830, 0.0
    %v1842 = vsel %vm166, %v1831, 0.0
    %v1843 = vadd.f32 %v1841, %v1842
    %v1844 = vrot.slane %v1843, 4
    %v1845 = vadd.f32 %v1843, %v1844
    %v1846 = vrot.slane %v1845, 2
    %v1847 = vadd.f32 %v1845, %v1846
    %v1848 = vrot.slane %v1847, 1
    %v1849 = vadd.f32 %v1847, %v1848
    %v1850 = vrcp.pop 16.0
    %v1851 = vmul.f32 16.0, %v1850
    %v1852 = vsub.f32 1.0, %v1851
    %v1853 = vmul.f32 %v1850, %v1852
    %v1854 = vadd.f32 %v1850, %v1853
    %vm1855 = vweird.f32 %v1850
    %v1856 = vsel %vm1855, %v1850, %v1854
    %v1857 = vmul.f32 %v1840, %v1856
    %v1858 = vmul.f32 %v1849, %v1856
    %v1859 = vadd.f32 %v855, %v1857
    %v1860 = vadd.f32 %v856, %v1858
    %v1861 = vld [vmem:[%s16] sm:$0x1]
    %v1862 = vld [vmem:[%s17] sm:$0x1]
    %v1863 = vsel %vm166, %v1859, 0.0
    %1864 = vadd.xlane.f32.xlu0 %v1863
    %v1865 = vpop.xlane.xlu0 %1864
    %v1866 = vsel %vm166, %v1860, 0.0
    %1867 = vadd.xlane.f32.xlu0 %v1866
    %v1868 = vpop.xlane.xlu0 %1867
    %v1869 = vmul.f32 %v1865, %v804
    %v1870 = vmul.f32 %v1868, %v804
    %v1871 = vmul.f32 %v1859, %v1859
    %v1872 = vmul.f32 %v1860, %v1860
    %v1873 = vsel %vm166, %v1871, 0.0
    %1874 = vadd.xlane.f32.xlu0 %v1873
    %v1875 = vpop.xlane.xlu0 %1874
    %v1876 = vsel %vm166, %v1872, 0.0
    %1877 = vadd.xlane.f32.xlu0 %v1876
    %v1878 = vpop.xlane.xlu0 %1877
    %v1879 = vmul.f32 %v1875, %v804
    %v1880 = vmul.f32 %v1878, %v804
    %v1881 = vmul.f32 %v1869, %v1869
    %v1882 = vmul.f32 %v1870, %v1870
    %v1883 = vsub.f32 %v1879, %v1881
    %v1884 = vsub.f32 %v1880, %v1882
    %v1885 = vsub.f32 %v1859, %v1869
    %v1886 = vsub.f32 %v1860, %v1870
    %v1887 = vadd.f32 %v1883, 1e-05
    %v1888 = vadd.f32 %v1884, 1e-05
    %v1889 = vrsqrt.pop %v1887
    %v1890 = vmul.f32 %v1889, %v1887
    %v1891 = vmul.f32 %v1890, %v1889
    %v1892 = vmul.f32 0.5, %v1891
    %v1893 = vsub.f32 1.5, %v1892
    %v1894 = vmul.f32 %v1889, %v1893
    %vm1895 = vweird.f32 %v1887
    %vm1896 = vweird.f32 %v1889
    %vm1897 = vmor %vm1895, %vm1896
    %v1898 = vsel %vm1897, %v1889, %v1894
    %v1899 = vrsqrt.pop %v1888
    %v1900 = vmul.f32 %v1899, %v1888
    %v1901 = vmul.f32 %v1900, %v1899
    %v1902 = vmul.f32 0.5, %v1901
    %v1903 = vsub.f32 1.5, %v1902
    %v1904 = vmul.f32 %v1899, %v1903
    %vm1905 = vweird.f32 %v1888
    %vm1906 = vweird.f32 %v1899
    %vm1907 = vmor %vm1905, %vm1906
    %v1908 = vsel %vm1907, %v1899, %v1904
    %v1909 = vmul.f32 %v1885, %v1898
    %v1910 = vmul.f32 %v1886, %v1908
    %v1912 = vperm.slane %v1861, 0
    %v1914 = vmul.f32 %v1909, %v1912
    %v1915 = vmul.f32 %v1910, %v1912
    %v1917 = vperm.slane %v1862, 0
    %v1919 = vadd.f32 %v1914, %v1917
    %v1920 = vadd.f32 %v1915, %v1917
    %v1921 = vld [vmem:[#allocation10] sm:$0xff]
    %v1922 = vld [vmem:[#allocation10 + $0x8] sm:$0xff]
    %v1923 = vld [vmem:[#allocation10 + $0x10] sm:$0xff]
    %v1924 = vld [vmem:[#allocation10 + $0x18] sm:$0xff]
    %v1925 = vld [vmem:[%s19] sm:$0x1]
    %v1927 = vperm.slane %v1925, 0
    %v1930 = vsel %vm166, %v1919, 0
    %v1933 = vsel %vm166, %v1920, 0
    %1935 = vmatpush.msra.mxu0 0.0
    %1936 = vmatpush.msra.mxu0 0.0
    %1937 = vmatpush.msra.mxu0 0.0
    %1938 = vmatpush.msra.mxu0 0.0
    %1939 = vmatpush.msra.mxu0 0.0
    %1940 = vmatpush.msra.mxu0 0.0
    %1941 = vmatpush.msra.mxu0 0.0
    %1942 = vmatpush.msra.mxu0 0.0
    %1943 = vmatpush.msra.mxu0 0.0
    %1944 = vmatpush.msra.mxu0 0.0
    %1945 = vmatpush.msra.mxu0 0.0
    %1946 = vmatpush.msra.mxu0 0.0
    %1947 = vmatpush.msra.mxu0 %v1924
    %1948 = vmatpush.msra.mxu0 %v1923
    %1949 = vmatpush.msra.mxu0 %v1922
    %1950 = vmatpush.msra.mxu0 %v1921
    %1951 = vmatmul.f32.gmra.mxu0 %v1930
    %v1952 = vpop.f32.mrf.mxu0
    %v1953 = vadd.f32 %v1927, %v1952
    %1954 = vmatmul.f32.gmra.mxu0 %v1933
    %v1955 = vpop.f32.mrf.mxu0
    %v1956 = vadd.f32 %v1927, %v1955
    %1957 = vdwg.mxu0
    %v1958 = vmax.f32 %v1953, 0.0
    %v1959 = vmax.f32 %v1956, 0.0
    %v1960 = vld [vmem:[%s20] sm:$0xff]
    %v1961 = vld [vmem:[%s20 + $0x8] sm:$0xff]
    %v1962 = vld [vmem:[%s20 + $0x10] sm:$0xff]
    %v1963 = vld [vmem:[%s20 + $0x18] sm:$0xff]
    %v1964 = vld [vmem:[%s20 + $0x20] sm:$0xff]
    %v1965 = vld [vmem:[%s20 + $0x28] sm:$0xff]
    %v1966 = vld [vmem:[%s20 + $0x30] sm:$0xff]
    %v1967 = vld [vmem:[%s20 + $0x38] sm:$0xff]
    %v1968 = vld [vmem:[%s21] sm:$0x1]
    %v1970 = vperm.slane %v1968, 0
    %vm1972 = vcmask 523264
    %v1974 = vsel %vm1972, %v1958, 0
    %v1977 = vsel %vm1972, %v1959, 0
    %1979 = vmatpush.msra.mxu0 0.0
    %1980 = vmatpush.msra.mxu0 0.0
    %1981 = vmatpush.msra.mxu0 0.0
    %1982 = vmatpush.msra.mxu0 0.0
    %1983 = vmatpush.msra.mxu0 0.0
    %1984 = vmatpush.msra.mxu0 0.0
    %1985 = vmatpush.msra.mxu0 0.0
    %1986 = vmatpush.msra.mxu0 0.0
    %1987 = vmatpush.msra.mxu0 %v1967
    %1988 = vmatpush.msra.mxu0 %v1966
    %1989 = vmatpush.msra.mxu0 %v1965
    %1990 = vmatpush.msra.mxu0 %v1964
    %1991 = vmatpush.msra.mxu0 %v1963
    %1992 = vmatpush.msra.mxu0 %v1962
    %1993 = vmatpush.msra.mxu0 %v1961
    %1994 = vmatpush.msra.mxu0 %v1960
    %1995 = vmatmul.f32.gmra.mxu0 %v1974
    %v1996 = vpop.f32.mrf.mxu0
    %v1997 = vadd.f32 %v1970, %v1996
    %1998 = vmatmul.f32.gmra.mxu0 %v1977
    %v1999 = vpop.f32.mrf.mxu0
    %v2000 = vadd.f32 %v1970, %v1999
    %2001 = vdwg.mxu0
    %v2002 = vadd.f32 %v1919, %v1997
    %v2003 = vadd.f32 %v1920, %v2000
    %v2004 = vld [vmem:[%s22] sm:$0x1]
    %v2005 = vld [vmem:[%s23] sm:$0x1]
    %v2006 = vsel %vm166, %v2002, 0.0
    %2007 = vadd.xlane.f32.xlu0 %v2006
    %v2008 = vpop.xlane.xlu0 %2007
    %v2009 = vsel %vm166, %v2003, 0.0
    %2010 = vadd.xlane.f32.xlu0 %v2009
    %v2011 = vpop.xlane.xlu0 %2010
    %v2012 = vmul.f32 %v2008, %v804
    %v2013 = vmul.f32 %v2011, %v804
    %v2014 = vmul.f32 %v2002, %v2002
    %v2015 = vmul.f32 %v2003, %v2003
    %v2016 = vsel %vm166, %v2014, 0.0
    %2017 = vadd.xlane.f32.xlu0 %v2016
    %v2018 = vpop.xlane.xlu0 %2017
    %v2019 = vsel %vm166, %v2015, 0.0
    %2020 = vadd.xlane.f32.xlu0 %v2019
    %v2021 = vpop.xlane.xlu0 %2020
    %v2022 = vmul.f32 %v2018, %v804
    %v2023 = vmul.f32 %v2021, %v804
    %v2024 = vmul.f32 %v2012, %v2012
    %v2025 = vmul.f32 %v2013, %v2013
    %v2026 = vsub.f32 %v2022, %v2024
    %v2027 = vsub.f32 %v2023, %v2025
    %v2028 = vsub.f32 %v2002, %v2012
    %v2029 = vsub.f32 %v2003, %v2013
    %v2030 = vadd.f32 %v2026, 1e-05
    %v2031 = vadd.f32 %v2027, 1e-05
    %v2032 = vrsqrt.pop %v2030
    %v2033 = vmul.f32 %v2032, %v2030
    %v2034 = vmul.f32 %v2033, %v2032
    %v2035 = vmul.f32 0.5, %v2034
    %v2036 = vsub.f32 1.5, %v2035
    %v2037 = vmul.f32 %v2032, %v2036
    %vm2038 = vweird.f32 %v2030
    %vm2039 = vweird.f32 %v2032
    %vm2040 = vmor %vm2038, %vm2039
    %v2041 = vsel %vm2040, %v2032, %v2037
    %v2042 = vrsqrt.pop %v2031
    %v2043 = vmul.f32 %v2042, %v2031
    %v2044 = vmul.f32 %v2043, %v2042
    %v2045 = vmul.f32 0.5, %v2044
    %v2046 = vsub.f32 1.5, %v2045
    %v2047 = vmul.f32 %v2042, %v2046
    %vm2048 = vweird.f32 %v2031
    %vm2049 = vweird.f32 %v2042
    %vm2050 = vmor %vm2048, %vm2049
    %v2051 = vsel %vm2050, %v2042, %v2047
    %v2052 = vmul.f32 %v2028, %v2041
    %v2053 = vmul.f32 %v2029, %v2051
    %v2055 = vperm.slane %v2004, 0
    %v2057 = vmul.f32 %v2052, %v2055
    %v2058 = vmul.f32 %v2053, %v2055
    %v2060 = vperm.slane %v2005, 0
    %v2062 = vadd.f32 %v2057, %v2060
    %v2063 = vadd.f32 %v2058, %v2060
    %2064 = vst.msk [vmem:[#allocation11] sm:$0xff] %vm166, %v2062
    %2065 = vst.msk [vmem:[#allocation11 + $0x8] sm:$0xff] %vm166, %v2063
    // Predicated region
    $region118: #{tpu_custom_call.1} parent=1 // pred_check
      _
    $region119: #{tpu_custom_call.1} parent=1 // pred_check_branch
      %2067 = sbr.rel (0) target = $region121
    $region120: #{tpu_custom_call.1} parent=1 // pred_region
      %2069 = vsyncadd [#allocation4], 0
      %s2070 = sshll.u32 [#allocation11], 4
      %s2071 = int_to_ptr.vmem [resolvable:$true] %s2070
      %s2072 = sshll.u32 %s24, 4
      %s2073 = int_to_ptr.hbm [resolvable:$true] %s2072
      %2078 = dma.vmem_to_hbm [thread:$0]  %s2071, 256, %s2073, [#allocation4], 128, 128, 8
    $region121: #{tpu_custom_call.1} parent=1 // pred_fallthru
      _
    // Predicated region
    $region122: #{tpu_custom_call.1} parent=1 // pred_check
      _
    $region123: #{tpu_custom_call.1} parent=1 // pred_check_branch
      %2080 = sbr.rel (0) target = $region125
    $region124: #{tpu_custom_call.1} parent=1 // pred_region
      %2082 = dma.done [#allocation4], 256
    $region125: #{tpu_custom_call.1} parent=1 // pred_fallthru
      _
    %2083 = vsyncpa [#allocation3], 1
    %2084 = vsyncpa [#allocation6], 1
    %2085 = vsyncpa [#allocation9], 1
    %2086 = vsyncpa [#allocation4], 1

</llo_original>
